<compile_context>
chip_gen: v7x
topology: tpu7x:2x2x1
jax: 0.10.0
libtpu: 0.0.40
codegen_flags: <defaults>
</compile_context>

<pallas_src>
import jax
import jax.numpy as jnp
from jax.experimental import pallas as pl
from jax.experimental.pallas import tpu as pltpu


def _round_up(x, m):
    return ((x + m - 1) // m) * m


# --------------------------------------------------------------------------
# Kernels
# --------------------------------------------------------------------------
def _kernel_obs_dependent(z_ref, a_ref, w1_ref, b1_ref, w2_ref, b2_ref,
                          w3_ref, b3_ref, w4_ref, b4_ref, w5_ref, b5_ref,
                          out_ref):
    f32, bf16 = jnp.float32, jnp.bfloat16
    # a_embedding: Linear -> Tanh -> Linear -> Tanh -> Linear -> Tanh
    h = jnp.tanh(jnp.dot(a_ref[...], w1_ref[...],
                         preferred_element_type=f32) + b1_ref[...])
    h = jnp.tanh(jnp.dot(h.astype(bf16), w2_ref[...],
                         preferred_element_type=f32) + b2_ref[...])
    u = jnp.tanh(jnp.dot(h.astype(bf16), w3_ref[...],
                         preferred_element_type=f32) + b3_ref[...])
    # sa_embedding on (z + u): Linear -> ReLU -> Linear
    s = z_ref[...].astype(f32) + u
    s = jnp.maximum(jnp.dot(s.astype(bf16), w4_ref[...],
                            preferred_element_type=f32) + b4_ref[...], 0.0)
    out = jnp.dot(s.astype(bf16), w5_ref[...],
                  preferred_element_type=f32) + b5_ref[...]
    out_ref[...] = out.astype(out_ref.dtype)


def _kernel_action_only(a_ref, w1_ref, b1_ref, w2_ref, b2_ref,
                        w3_ref, b3_ref, out_ref):
    f32, bf16 = jnp.float32, jnp.bfloat16
    h = jnp.tanh(jnp.dot(a_ref[...], w1_ref[...],
                         preferred_element_type=f32) + b1_ref[...])
    h = jnp.tanh(jnp.dot(h.astype(bf16), w2_ref[...],
                         preferred_element_type=f32) + b2_ref[...])
    u = jnp.tanh(jnp.dot(h.astype(bf16), w3_ref[...],
                         preferred_element_type=f32) + b3_ref[...])
    out_ref[...] = u.astype(out_ref.dtype)


# --------------------------------------------------------------------------
# Wrapper
# --------------------------------------------------------------------------
def _default_vmem_limit_bytes():
    # v7x: 64 MiB physical VMEM per TensorCore -> keep the conservative 32 MiB
    # scoped limit.  v5e/v5p/v6e: 128 MiB physical -> allow larger tiles.
    try:
        kind = jax.devices()[0].device_kind.lower()
    except Exception:
        return 32 << 20
    return (32 << 20) if "v7" in kind else (64 << 20)


def action_encoder_forward(z, a, params, *, obs_dependent=True, block_b=None,
                           out_dtype=jnp.float32, vmem_limit_bytes=None):
    """z: [B, feature_dim] (unused when obs_dependent=False), a: [B, action_dim]
    -> [B, feature_dim]."""
    (w1, b1, w2, b2, w3, b3, w4, b4, w5, b5) = params
    B, action_dim = a.shape
    feature_dim = w3.shape[1]
    hidden_dim = w4.shape[1]
    assert w1.shape == (action_dim, 64) and w2.shape == (64, 64)
    assert w4.shape == (feature_dim, hidden_dim)
    assert w5.shape == (hidden_dim, feature_dim)
    if obs_dependent:
        assert z is not None and z.shape == (B, feature_dim)

    bf16, f32 = jnp.bfloat16, jnp.float32
    out_itemsize = jnp.dtype(out_dtype).itemsize

    # Per-stage lane-dense padded widths.
    D64 = 128                              # the two 64-wide a_embedding layers
    Df = _round_up(feature_dim, 128)       # z / u / out lanes, W3 & W5 N-dims
    Dh = _round_up(hidden_dim, 128)        # W4 N-dim, W5 K-dim

    if vmem_limit_bytes is None:
        vmem_limit_bytes = _default_vmem_limit_bytes()

    # Batch tile: always a multiple of 16 (bf16 sublanes), aim for >= 2 grid
    # steps so both v7x TensorCores shard the "parallel" axis, cap at 1024 to
    # amortize the ~0.35 us per-step overhead without blowing VMEM.
    if block_b is None:
        block_b = min(1024, max(16, _round_up((B + 1) // 2, 16)))
    block_b = max(16, _round_up(block_b, 16))

    def vmem_estimate(bb):
        # Double-buffered streams.
        est = 2 * bb * action_dim * 2 + 2 * bb * Df * out_itemsize
        # Single-buffered resident weights (bf16) + biases (f32).
        est += (action_dim * D64 + D64 * D64 + D64 * Df) * 2
        est += (2 * D64 + Df) * 4
        if obs_dependent:
            est += 2 * bb * Df * 2                          # z stream
            est += (Df * Dh + Dh * Df) * 2 + (Dh + Df) * 4  # W4/W5/b4/b5
            est += bb * max(Df, Dh) * 4                     # f32 temporaries
        else:
            est += bb * Df * 4
        return est

    while block_b > 16 and vmem_estimate(block_b) > vmem_limit_bytes // 2:
        block_b = max(16, _round_up(block_b // 2, 16))

    Bp = _round_up(B, block_b)
    grid = (Bp // block_b,)

    def pad2(w, rows, cols):
        return jnp.pad(w, ((0, rows - w.shape[0]), (0, cols - w.shape[1])))

    def padb(v, cols):
        return jnp.pad(v, (0, cols - v.shape[0])).reshape(1, cols).astype(f32)

    # Streamed operands (bf16, batch zero-padded).  Zero padding is exact:
    # zero weight columns / rows + zero bias pad propagate zeros through
    # tanh / relu / linear, and the wrapper slices the real columns back out.
    a_p = jnp.pad(a, ((0, Bp - B), (0, 0))).astype(bf16)

    # Resident per-layer weights (bf16) / biases (f32), natural padded shapes.
    w1_p = pad2(w1, action_dim, D64).astype(bf16)
    w2_p = pad2(w2, D64, D64).astype(bf16)
    w3_p = pad2(w3, D64, Df).astype(bf16)
    b1_p, b2_p, b3_p = padb(b1, D64), padb(b2, D64), padb(b3, Df)

    if obs_dependent:
        z_p = pad2(z.astype(f32), Bp, Df).astype(bf16)
        w4_p = pad2(w4, Df, Dh).astype(bf16)
        w5_p = pad2(w5, Dh, Df).astype(bf16)
        b4_p, b5_p = padb(b4, Dh), padb(b5, Df)
        kernel = _kernel_obs_dependent
        operands = (z_p, a_p, w1_p, b1_p, w2_p, b2_p, w3_p, b3_p,
                    w4_p, b4_p, w5_p, b5_p)
        stream_widths = (Df, action_dim)                  # z, a
        resident_shapes = ((action_dim, D64), (1, D64),   # W1, b1
                           (D64, D64), (1, D64),          # W2, b2
                           (D64, Df), (1, Df),            # W3, b3
                           (Df, Dh), (1, Dh),             # W4, b4
                           (Dh, Df), (1, Df))             # W5, b5
    else:
        kernel = _kernel_action_only
        operands = (a_p, w1_p, b1_p, w2_p, b2_p, w3_p, b3_p)
        stream_widths = (action_dim,)                     # a only (no z DMA)
        resident_shapes = ((action_dim, D64), (1, D64),
                           (D64, D64), (1, D64),
                           (D64, Df), (1, Df))

    def build_and_run(single_buffer_residents):
        def stream_spec(width):
            return pl.BlockSpec((block_b, width), lambda i: (i, 0))

        def resident_spec(shape):
            if single_buffer_residents:
                return pl.BlockSpec(shape, lambda i: (0, 0),
                                    pipeline_mode=pl.Buffered(1))
            return pl.BlockSpec(shape, lambda i: (0, 0))

        in_specs = ([stream_spec(w) for w in stream_widths]
                    + [resident_spec(s) for s in resident_shapes])

        return pl.pallas_call(
            kernel,
            out_shape=jax.ShapeDtypeStruct((Bp, Df), out_dtype),
            grid_spec=pltpu.PrefetchScalarGridSpec(
                num_scalar_prefetch=0,
                grid=grid,
                in_specs=in_specs,
                out_specs=stream_spec(Df),
            ),
            compiler_params=pltpu.CompilerParams(
                dimension_semantics=("parallel",),
                vmem_limit_bytes=vmem_limit_bytes),
        )(*operands)

    try:
        # Constant-index weights single-buffered (halves resident VMEM).
        out_p = build_and_run(True)
    except Exception:
        # Fallback for runtimes that reject pl.Buffered(1) on pallas_call specs.
        out_p = build_and_run(False)

    # Lane-dense store inside the kernel; cheap XLA slice outside.
    return out_p[:B, :feature_dim]


# --------------------------------------------------------------------------
# Reference + test harness
# --------------------------------------------------------------------------
def init_params(key, action_dim, feature_dim, hidden_dim):
    """Deterministic synthetic init (stand-in for utils.weight_init)."""
    ks = jax.random.split(key, 10)

    def lin(kw, kb, din, dout):
        w = jax.random.normal(kw, (din, dout), jnp.float32) / jnp.sqrt(din)
        b = jax.random.normal(kb, (dout,), jnp.float32) * 0.01
        return w, b

    w1, b1 = lin(ks[0], ks[1], action_dim, 64)
    w2, b2 = lin(ks[2], ks[3], 64, 64)
    w3, b3 = lin(ks[4], ks[5], 64, feature_dim)
    w4, b4 = lin(ks[6], ks[7], feature_dim, hidden_dim)
    w5, b5 = lin(ks[8], ks[9], hidden_dim, feature_dim)
    return (w1, b1, w2, b2, w3, b3, w4, b4, w5, b5)


def reference_forward(z, a, params, obs_dependent):
    """Pure-JAX reference using the same bf16-operand / f32-accumulate recipe."""
    (w1, b1, w2, b2, w3, b3, w4, b4, w5, b5) = params
    bf16, f32 = jnp.bfloat16, jnp.float32

    def lin(x, w, b):
        return jnp.dot(x.astype(bf16), w.astype(bf16),
                       preferred_element_type=f32) + b

    h = jnp.tanh(lin(a, w1, b1))
    h = jnp.tanh(lin(h, w2, b2))
    u = jnp.tanh(lin(h, w3, b3))
    if not obs_dependent:
        return u
    s = z.astype(bf16).astype(f32) + u
    s = jnp.maximum(lin(s, w4, b4), 0.0)
    return lin(s, w5, b5)


if __name__ == "__main__":
    key = jax.random.PRNGKey(0)

    configs = [
        # (batch, action_dim, feature_dim, hidden_dim)
        (8, 8, 32, 32),      # everything fits in one 128-wide stage
        (40, 6, 50, 160),    # Df (128) != Dh (256), multi-step grid
    ]
    for batch, action_dim, feature_dim, hidden_dim in configs:
        key, kz, ka, kp = jax.random.split(key, 4)
        z = jax.random.normal(kz, (batch, feature_dim), jnp.float32)
        a = jax.random.normal(ka, (batch, action_dim), jnp.float32)
        params = init_params(kp, action_dim, feature_dim, hidden_dim)

        for obs_dependent in (True, False):
            out = action_encoder_forward(z, a, params,
                                         obs_dependent=obs_dependent)
            out = jax.block_until_ready(out)
            ref = reference_forward(z, a, params, obs_dependent)
            assert out.shape == (batch, feature_dim)
            assert jnp.allclose(out, ref, atol=1e-4, rtol=1e-4), (
                f"mismatch vs reference (obs_dependent={obs_dependent}, "
                f"dims={(batch, action_dim, feature_dim, hidden_dim)})")

    print("KERNEL_OK")
</pallas_src>

<mosaic_0001>
module attributes {stable_mosaic.version = 11 : i64} {
  func.func @_kernel_obs_dependent(%arg0: i32, %arg1: memref<16x128xbf16, #tpu.memory_space<vmem>>, %arg2: memref<16x8xbf16, #tpu.memory_space<vmem>>, %arg3: memref<8x128xbf16, #tpu.memory_space<vmem>>, %arg4: memref<1x128xf32, #tpu.memory_space<vmem>>, %arg5: memref<128x128xbf16, #tpu.memory_space<vmem>>, %arg6: memref<1x128xf32, #tpu.memory_space<vmem>>, %arg7: memref<128x128xbf16, #tpu.memory_space<vmem>>, %arg8: memref<1x128xf32, #tpu.memory_space<vmem>>, %arg9: memref<128x128xbf16, #tpu.memory_space<vmem>>, %arg10: memref<1x128xf32, #tpu.memory_space<vmem>>, %arg11: memref<128x128xbf16, #tpu.memory_space<vmem>>, %arg12: memref<1x128xf32, #tpu.memory_space<vmem>>, %arg13: memref<16x128xf32, #tpu.memory_space<vmem>>) attributes {dimension_semantics = [#tpu.dimension_semantics<parallel>], iteration_bounds = array<i64: 1>, scalar_prefetch = 0 : i64, scratch_operands = 0 : i64, tpu.core_type = #tpu.core_type<tc>, window_params = [{transform_indices = @transform_0, window_bounds = array<i64: 16, 128>}, {transform_indices = @transform_1, window_bounds = array<i64: 16, 8>}, {pipeline_mode = #tpu.pipeline_mode<synchronous>, transform_indices = @transform_2, window_bounds = array<i64: 8, 128>}, {pipeline_mode = #tpu.pipeline_mode<synchronous>, transform_indices = @transform_3, window_bounds = array<i64: 1, 128>}, {pipeline_mode = #tpu.pipeline_mode<synchronous>, transform_indices = @transform_4, window_bounds = array<i64: 128, 128>}, {pipeline_mode = #tpu.pipeline_mode<synchronous>, transform_indices = @transform_5, window_bounds = array<i64: 1, 128>}, {pipeline_mode = #tpu.pipeline_mode<synchronous>, transform_indices = @transform_6, window_bounds = array<i64: 128, 128>}, {pipeline_mode = #tpu.pipeline_mode<synchronous>, transform_indices = @transform_7, window_bounds = array<i64: 1, 128>}, {pipeline_mode = #tpu.pipeline_mode<synchronous>, transform_indices = @transform_8, window_bounds = array<i64: 128, 128>}, {pipeline_mode = #tpu.pipeline_mode<synchronous>, transform_indices = @transform_9, window_bounds = array<i64: 1, 128>}, {pipeline_mode = #tpu.pipeline_mode<synchronous>, transform_indices = @transform_10, window_bounds = array<i64: 128, 128>}, {pipeline_mode = #tpu.pipeline_mode<synchronous>, transform_indices = @transform_11, window_bounds = array<i64: 1, 128>}, {transform_indices = @transform_12, window_bounds = array<i64: 16, 128>}]} {
    %c0 = arith.constant 0 : index
    %c0_0 = arith.constant 0 : index
    %0 = vector.load %arg2[%c0, %c0_0] : memref<16x8xbf16, #tpu.memory_space<vmem>>, vector<16x8xbf16>
    %c0_1 = arith.constant 0 : index
    %c0_2 = arith.constant 0 : index
    %1 = vector.load %arg3[%c0_1, %c0_2] : memref<8x128xbf16, #tpu.memory_space<vmem>>, vector<8x128xbf16>
    %cst = arith.constant dense<0.000000e+00> : vector<16x128xf32>
    %2 = tpu.matmul %0, %1, %cst {dimension_numbers = #tpu.dot_dimension_numbers<[1], [0], [0], [1], [0, 0, 1, 1], [], []>} : vector<16x8xbf16>, vector<8x128xbf16>, vector<16x128xf32> -> vector<16x128xf32>
    %c0_3 = arith.constant 0 : index
    %c0_4 = arith.constant 0 : index
    %3 = vector.load %arg4[%c0_3, %c0_4] : memref<1x128xf32, #tpu.memory_space<vmem>>, vector<1x128xf32>
    %4 = vector.broadcast %3 : vector<1x128xf32> to vector<16x128xf32>
    %5 = arith.addf %2, %4 : vector<16x128xf32>
    %6 = math.tanh %5 : vector<16x128xf32>
    %7 = arith.truncf %6 : vector<16x128xf32> to vector<16x128xbf16>
    %c0_5 = arith.constant 0 : index
    %c0_6 = arith.constant 0 : index
    %8 = vector.load %arg5[%c0_5, %c0_6] : memref<128x128xbf16, #tpu.memory_space<vmem>>, vector<128x128xbf16>
    %cst_7 = arith.constant dense<0.000000e+00> : vector<16x128xf32>
    %9 = tpu.matmul %7, %8, %cst_7 {dimension_numbers = #tpu.dot_dimension_numbers<[1], [0], [0], [1], [0, 0, 1, 1], [], []>} : vector<16x128xbf16>, vector<128x128xbf16>, vector<16x128xf32> -> vector<16x128xf32>
    %c0_8 = arith.constant 0 : index
    %c0_9 = arith.constant 0 : index
    %10 = vector.load %arg6[%c0_8, %c0_9] : memref<1x128xf32, #tpu.memory_space<vmem>>, vector<1x128xf32>
    %11 = vector.broadcast %10 : vector<1x128xf32> to vector<16x128xf32>
    %12 = arith.addf %9, %11 : vector<16x128xf32>
    %13 = math.tanh %12 : vector<16x128xf32>
    %14 = arith.truncf %13 : vector<16x128xf32> to vector<16x128xbf16>
    %c0_10 = arith.constant 0 : index
    %c0_11 = arith.constant 0 : index
    %15 = vector.load %arg7[%c0_10, %c0_11] : memref<128x128xbf16, #tpu.memory_space<vmem>>, vector<128x128xbf16>
    %cst_12 = arith.constant dense<0.000000e+00> : vector<16x128xf32>
    %16 = tpu.matmul %14, %15, %cst_12 {dimension_numbers = #tpu.dot_dimension_numbers<[1], [0], [0], [1], [0, 0, 1, 1], [], []>} : vector<16x128xbf16>, vector<128x128xbf16>, vector<16x128xf32> -> vector<16x128xf32>
    %c0_13 = arith.constant 0 : index
    %c0_14 = arith.constant 0 : index
    %17 = vector.load %arg8[%c0_13, %c0_14] : memref<1x128xf32, #tpu.memory_space<vmem>>, vector<1x128xf32>
    %18 = vector.broadcast %17 : vector<1x128xf32> to vector<16x128xf32>
    %19 = arith.addf %16, %18 : vector<16x128xf32>
    %20 = math.tanh %19 : vector<16x128xf32>
    %c0_15 = arith.constant 0 : index
    %c0_16 = arith.constant 0 : index
    %21 = vector.load %arg1[%c0_15, %c0_16] : memref<16x128xbf16, #tpu.memory_space<vmem>>, vector<16x128xbf16>
    %22 = arith.extf %21 : vector<16x128xbf16> to vector<16x128xf32>
    %23 = arith.addf %22, %20 : vector<16x128xf32>
    %24 = arith.truncf %23 : vector<16x128xf32> to vector<16x128xbf16>
    %c0_17 = arith.constant 0 : index
    %c0_18 = arith.constant 0 : index
    %25 = vector.load %arg9[%c0_17, %c0_18] : memref<128x128xbf16, #tpu.memory_space<vmem>>, vector<128x128xbf16>
    %cst_19 = arith.constant dense<0.000000e+00> : vector<16x128xf32>
    %26 = tpu.matmul %24, %25, %cst_19 {dimension_numbers = #tpu.dot_dimension_numbers<[1], [0], [0], [1], [0, 0, 1, 1], [], []>} : vector<16x128xbf16>, vector<128x128xbf16>, vector<16x128xf32> -> vector<16x128xf32>
    %c0_20 = arith.constant 0 : index
    %c0_21 = arith.constant 0 : index
    %27 = vector.load %arg10[%c0_20, %c0_21] : memref<1x128xf32, #tpu.memory_space<vmem>>, vector<1x128xf32>
    %28 = vector.broadcast %27 : vector<1x128xf32> to vector<16x128xf32>
    %29 = arith.addf %26, %28 : vector<16x128xf32>
    %cst_22 = arith.constant 0.000000e+00 : f32
    %30 = vector.broadcast %cst_22 : f32 to vector<16x128xf32>
    %31 = arith.maximumf %29, %30 : vector<16x128xf32>
    %32 = arith.truncf %31 : vector<16x128xf32> to vector<16x128xbf16>
    %c0_23 = arith.constant 0 : index
    %c0_24 = arith.constant 0 : index
    %33 = vector.load %arg11[%c0_23, %c0_24] : memref<128x128xbf16, #tpu.memory_space<vmem>>, vector<128x128xbf16>
    %cst_25 = arith.constant dense<0.000000e+00> : vector<16x128xf32>
    %34 = tpu.matmul %32, %33, %cst_25 {dimension_numbers = #tpu.dot_dimension_numbers<[1], [0], [0], [1], [0, 0, 1, 1], [], []>} : vector<16x128xbf16>, vector<128x128xbf16>, vector<16x128xf32> -> vector<16x128xf32>
    %c0_26 = arith.constant 0 : index
    %c0_27 = arith.constant 0 : index
    %35 = vector.load %arg12[%c0_26, %c0_27] : memref<1x128xf32, #tpu.memory_space<vmem>>, vector<1x128xf32>
    %36 = vector.broadcast %35 : vector<1x128xf32> to vector<16x128xf32>
    %37 = arith.addf %34, %36 : vector<16x128xf32>
    %c0_28 = arith.constant 0 : index
    %c0_29 = arith.constant 0 : index
    %38 = vector.load %arg13[%c0_28, %c0_29] : memref<16x128xf32, #tpu.memory_space<vmem>>, vector<16x128xf32>
    tpu.vector_store %arg13[%c0_28, %c0_29], %37 {strides = array<i32>} : memref<16x128xf32, #tpu.memory_space<vmem>>, vector<16x128xf32>,
    return
  }
  func.func @transform_0(%arg0: i32) -> (i32, i32) {
    %c0_i32 = arith.constant 0 : i32
    %c0_i32_0 = arith.constant 0 : i32
    return %arg0, %c0_i32 : i32, i32
  }
  func.func @transform_1(%arg0: i32) -> (i32, i32) {
    %c0_i32 = arith.constant 0 : i32
    %c0_i32_0 = arith.constant 0 : i32
    return %arg0, %c0_i32 : i32, i32
  }
  func.func @transform_2(%arg0: i32) -> (i32, i32) {
    %c0_i32 = arith.constant 0 : i32
    %c0_i32_0 = arith.constant 0 : i32
    %c0_i32_1 = arith.constant 0 : i32
    return %c0_i32, %c0_i32_0 : i32, i32
  }
  func.func @transform_3(%arg0: i32) -> (i32, i32) {
    %c0_i32 = arith.constant 0 : i32
    %c0_i32_0 = arith.constant 0 : i32
    %c0_i32_1 = arith.constant 0 : i32
    return %c0_i32, %c0_i32_0 : i32, i32
  }
  func.func @transform_4(%arg0: i32) -> (i32, i32) {
    %c0_i32 = arith.constant 0 : i32
    %c0_i32_0 = arith.constant 0 : i32
    %c0_i32_1 = arith.constant 0 : i32
    return %c0_i32, %c0_i32_0 : i32, i32
  }
  func.func @transform_5(%arg0: i32) -> (i32, i32) {
    %c0_i32 = arith.constant 0 : i32
    %c0_i32_0 = arith.constant 0 : i32
    %c0_i32_1 = arith.constant 0 : i32
    return %c0_i32, %c0_i32_0 : i32, i32
  }
  func.func @transform_6(%arg0: i32) -> (i32, i32) {
    %c0_i32 = arith.constant 0 : i32
    %c0_i32_0 = arith.constant 0 : i32
    %c0_i32_1 = arith.constant 0 : i32
    return %c0_i32, %c0_i32_0 : i32, i32
  }
  func.func @transform_7(%arg0: i32) -> (i32, i32) {
    %c0_i32 = arith.constant 0 : i32
    %c0_i32_0 = arith.constant 0 : i32
    %c0_i32_1 = arith.constant 0 : i32
    return %c0_i32, %c0_i32_0 : i32, i32
  }
  func.func @transform_8(%arg0: i32) -> (i32, i32) {
    %c0_i32 = arith.constant 0 : i32
    %c0_i32_0 = arith.constant 0 : i32
    %c0_i32_1 = arith.constant 0 : i32
    return %c0_i32, %c0_i32_0 : i32, i32
  }
  func.func @transform_9(%arg0: i32) -> (i32, i32) {
    %c0_i32 = arith.constant 0 : i32
    %c0_i32_0 = arith.constant 0 : i32
    %c0_i32_1 = arith.constant 0 : i32
    return %c0_i32, %c0_i32_0 : i32, i32
  }
  func.func @transform_10(%arg0: i32) -> (i32, i32) {
    %c0_i32 = arith.constant 0 : i32
    %c0_i32_0 = arith.constant 0 : i32
    %c0_i32_1 = arith.constant 0 : i32
    return %c0_i32, %c0_i32_0 : i32, i32
  }
  func.func @transform_11(%arg0: i32) -> (i32, i32) {
    %c0_i32 = arith.constant 0 : i32
    %c0_i32_0 = arith.constant 0 : i32
    %c0_i32_1 = arith.constant 0 : i32
    return %c0_i32, %c0_i32_0 : i32, i32
  }
  func.func @transform_12(%arg0: i32) -> (i32, i32) {
    %c0_i32 = arith.constant 0 : i32
    %c0_i32_0 = arith.constant 0 : i32
    return %arg0, %c0_i32 : i32, i32
  }
}

module attributes {stable_mosaic.version = 11 : i64} {
  func.func @_kernel_obs_dependent(%arg0: i32, %arg1: memref<16x128xbf16, #tpu.memory_space<vmem>>, %arg2: memref<16x8xbf16, #tpu.memory_space<vmem>>, %arg3: memref<8x128xbf16, #tpu.memory_space<vmem>>, %arg4: memref<1x128xf32, #tpu.memory_space<vmem>>, %arg5: memref<128x128xbf16, #tpu.memory_space<vmem>>, %arg6: memref<1x128xf32, #tpu.memory_space<vmem>>, %arg7: memref<128x128xbf16, #tpu.memory_space<vmem>>, %arg8: memref<1x128xf32, #tpu.memory_space<vmem>>, %arg9: memref<128x128xbf16, #tpu.memory_space<vmem>>, %arg10: memref<1x128xf32, #tpu.memory_space<vmem>>, %arg11: memref<128x128xbf16, #tpu.memory_space<vmem>>, %arg12: memref<1x128xf32, #tpu.memory_space<vmem>>, %arg13: memref<16x128xf32, #tpu.memory_space<vmem>>) attributes {dimension_semantics = [#tpu.dimension_semantics<parallel>], iteration_bounds = array<i64: 1>, scalar_prefetch = 0 : i64, scratch_operands = 0 : i64, tpu.core_type = #tpu.core_type<tc>, window_params = [{transform_indices = @transform_0, window_bounds = array<i64: 16, 128>}, {transform_indices = @transform_1, window_bounds = array<i64: 16, 8>}, {pipeline_mode = #tpu.pipeline_mode<synchronous>, transform_indices = @transform_2, window_bounds = array<i64: 8, 128>}, {pipeline_mode = #tpu.pipeline_mode<synchronous>, transform_indices = @transform_3, window_bounds = array<i64: 1, 128>}, {pipeline_mode = #tpu.pipeline_mode<synchronous>, transform_indices = @transform_4, window_bounds = array<i64: 128, 128>}, {pipeline_mode = #tpu.pipeline_mode<synchronous>, transform_indices = @transform_5, window_bounds = array<i64: 1, 128>}, {pipeline_mode = #tpu.pipeline_mode<synchronous>, transform_indices = @transform_6, window_bounds = array<i64: 128, 128>}, {pipeline_mode = #tpu.pipeline_mode<synchronous>, transform_indices = @transform_7, window_bounds = array<i64: 1, 128>}, {pipeline_mode = #tpu.pipeline_mode<synchronous>, transform_indices = @transform_8, window_bounds = array<i64: 128, 128>}, {pipeline_mode = #tpu.pipeline_mode<synchronous>, transform_indices = @transform_9, window_bounds = array<i64: 1, 128>}, {pipeline_mode = #tpu.pipeline_mode<synchronous>, transform_indices = @transform_10, window_bounds = array<i64: 128, 128>}, {pipeline_mode = #tpu.pipeline_mode<synchronous>, transform_indices = @transform_11, window_bounds = array<i64: 1, 128>}, {transform_indices = @transform_12, window_bounds = array<i64: 16, 128>}]} {
    %c0 = arith.constant 0 : index
    %c0_0 = arith.constant 0 : index
    %0 = vector.load %arg2[%c0, %c0_0] : memref<16x8xbf16, #tpu.memory_space<vmem>>, vector<16x8xbf16>
    %c0_1 = arith.constant 0 : index
    %c0_2 = arith.constant 0 : index
    %1 = vector.load %arg3[%c0_1, %c0_2] : memref<8x128xbf16, #tpu.memory_space<vmem>>, vector<8x128xbf16>
    %cst = arith.constant dense<0.000000e+00> : vector<16x128xf32>
    %2 = tpu.matmul %0, %1, %cst {dimension_numbers = #tpu.dot_dimension_numbers<[1], [0], [0], [1], [0, 0, 1, 1], [], []>} : vector<16x8xbf16>, vector<8x128xbf16>, vector<16x128xf32> -> vector<16x128xf32>
    %c0_3 = arith.constant 0 : index
    %c0_4 = arith.constant 0 : index
    %3 = vector.load %arg4[%c0_3, %c0_4] : memref<1x128xf32, #tpu.memory_space<vmem>>, vector<1x128xf32>
    %4 = vector.broadcast %3 : vector<1x128xf32> to vector<16x128xf32>
    %5 = arith.addf %2, %4 : vector<16x128xf32>
    %6 = math.tanh %5 : vector<16x128xf32>
    %7 = arith.truncf %6 : vector<16x128xf32> to vector<16x128xbf16>
    %c0_5 = arith.constant 0 : index
    %c0_6 = arith.constant 0 : index
    %8 = vector.load %arg5[%c0_5, %c0_6] : memref<128x128xbf16, #tpu.memory_space<vmem>>, vector<128x128xbf16>
    %cst_7 = arith.constant dense<0.000000e+00> : vector<16x128xf32>
    %9 = tpu.matmul %7, %8, %cst_7 {dimension_numbers = #tpu.dot_dimension_numbers<[1], [0], [0], [1], [0, 0, 1, 1], [], []>} : vector<16x128xbf16>, vector<128x128xbf16>, vector<16x128xf32> -> vector<16x128xf32>
    %c0_8 = arith.constant 0 : index
    %c0_9 = arith.constant 0 : index
    %10 = vector.load %arg6[%c0_8, %c0_9] : memref<1x128xf32, #tpu.memory_space<vmem>>, vector<1x128xf32>
    %11 = vector.broadcast %10 : vector<1x128xf32> to vector<16x128xf32>
    %12 = arith.addf %9, %11 : vector<16x128xf32>
    %13 = math.tanh %12 : vector<16x128xf32>
    %14 = arith.truncf %13 : vector<16x128xf32> to vector<16x128xbf16>
    %c0_10 = arith.constant 0 : index
    %c0_11 = arith.constant 0 : index
    %15 = vector.load %arg7[%c0_10, %c0_11] : memref<128x128xbf16, #tpu.memory_space<vmem>>, vector<128x128xbf16>
    %cst_12 = arith.constant dense<0.000000e+00> : vector<16x128xf32>
    %16 = tpu.matmul %14, %15, %cst_12 {dimension_numbers = #tpu.dot_dimension_numbers<[1], [0], [0], [1], [0, 0, 1, 1], [], []>} : vector<16x128xbf16>, vector<128x128xbf16>, vector<16x128xf32> -> vector<16x128xf32>
    %c0_13 = arith.constant 0 : index
    %c0_14 = arith.constant 0 : index
    %17 = vector.load %arg8[%c0_13, %c0_14] : memref<1x128xf32, #tpu.memory_space<vmem>>, vector<1x128xf32>
    %18 = vector.broadcast %17 : vector<1x128xf32> to vector<16x128xf32>
    %19 = arith.addf %16, %18 : vector<16x128xf32>
    %20 = math.tanh %19 : vector<16x128xf32>
    %c0_15 = arith.constant 0 : index
    %c0_16 = arith.constant 0 : index
    %21 = vector.load %arg1[%c0_15, %c0_16] : memref<16x128xbf16, #tpu.memory_space<vmem>>, vector<16x128xbf16>
    %22 = arith.extf %21 : vector<16x128xbf16> to vector<16x128xf32>
    %23 = arith.addf %22, %20 : vector<16x128xf32>
    %24 = arith.truncf %23 : vector<16x128xf32> to vector<16x128xbf16>
    %c0_17 = arith.constant 0 : index
    %c0_18 = arith.constant 0 : index
    %25 = vector.load %arg9[%c0_17, %c0_18] : memref<128x128xbf16, #tpu.memory_space<vmem>>, vector<128x128xbf16>
    %cst_19 = arith.constant dense<0.000000e+00> : vector<16x128xf32>
    %26 = tpu.matmul %24, %25, %cst_19 {dimension_numbers = #tpu.dot_dimension_numbers<[1], [0], [0], [1], [0, 0, 1, 1], [], []>} : vector<16x128xbf16>, vector<128x128xbf16>, vector<16x128xf32> -> vector<16x128xf32>
    %c0_20 = arith.constant 0 : index
    %c0_21 = arith.constant 0 : index
    %27 = vector.load %arg10[%c0_20, %c0_21] : memref<1x128xf32, #tpu.memory_space<vmem>>, vector<1x128xf32>
    %28 = vector.broadcast %27 : vector<1x128xf32> to vector<16x128xf32>
    %29 = arith.addf %26, %28 : vector<16x128xf32>
    %cst_22 = arith.constant 0.000000e+00 : f32
    %30 = vector.broadcast %cst_22 : f32 to vector<16x128xf32>
    %31 = arith.maximumf %29, %30 : vector<16x128xf32>
    %32 = arith.truncf %31 : vector<16x128xf32> to vector<16x128xbf16>
    %c0_23 = arith.constant 0 : index
    %c0_24 = arith.constant 0 : index
    %33 = vector.load %arg11[%c0_23, %c0_24] : memref<128x128xbf16, #tpu.memory_space<vmem>>, vector<128x128xbf16>
    %cst_25 = arith.constant dense<0.000000e+00> : vector<16x128xf32>
    %34 = tpu.matmul %32, %33, %cst_25 {dimension_numbers = #tpu.dot_dimension_numbers<[1], [0], [0], [1], [0, 0, 1, 1], [], []>} : vector<16x128xbf16>, vector<128x128xbf16>, vector<16x128xf32> -> vector<16x128xf32>
    %c0_26 = arith.constant 0 : index
    %c0_27 = arith.constant 0 : index
    %35 = vector.load %arg12[%c0_26, %c0_27] : memref<1x128xf32, #tpu.memory_space<vmem>>, vector<1x128xf32>
    %36 = vector.broadcast %35 : vector<1x128xf32> to vector<16x128xf32>
    %37 = arith.addf %34, %36 : vector<16x128xf32>
    %c0_28 = arith.constant 0 : index
    %c0_29 = arith.constant 0 : index
    %38 = vector.load %arg13[%c0_28, %c0_29] : memref<16x128xf32, #tpu.memory_space<vmem>>, vector<16x128xf32>
    tpu.vector_store %arg13[%c0_28, %c0_29], %37 {strides = array<i32>} : memref<16x128xf32, #tpu.memory_space<vmem>>, vector<16x128xf32>,
    return
  }
  func.func @transform_0(%arg0: i32) -> (i32, i32) {
    %c0_i32 = arith.constant 0 : i32
    %c0_i32_0 = arith.constant 0 : i32
    return %arg0, %c0_i32 : i32, i32
  }
  func.func @transform_1(%arg0: i32) -> (i32, i32) {
    %c0_i32 = arith.constant 0 : i32
    %c0_i32_0 = arith.constant 0 : i32
    return %arg0, %c0_i32 : i32, i32
  }
  func.func @transform_2(%arg0: i32) -> (i32, i32) {
    %c0_i32 = arith.constant 0 : i32
    %c0_i32_0 = arith.constant 0 : i32
    %c0_i32_1 = arith.constant 0 : i32
    return %c0_i32, %c0_i32_0 : i32, i32
  }
  func.func @transform_3(%arg0: i32) -> (i32, i32) {
    %c0_i32 = arith.constant 0 : i32
    %c0_i32_0 = arith.constant 0 : i32
    %c0_i32_1 = arith.constant 0 : i32
    return %c0_i32, %c0_i32_0 : i32, i32
  }
  func.func @transform_4(%arg0: i32) -> (i32, i32) {
    %c0_i32 = arith.constant 0 : i32
    %c0_i32_0 = arith.constant 0 : i32
    %c0_i32_1 = arith.constant 0 : i32
    return %c0_i32, %c0_i32_0 : i32, i32
  }
  func.func @transform_5(%arg0: i32) -> (i32, i32) {
    %c0_i32 = arith.constant 0 : i32
    %c0_i32_0 = arith.constant 0 : i32
    %c0_i32_1 = arith.constant 0 : i32
    return %c0_i32, %c0_i32_0 : i32, i32
  }
  func.func @transform_6(%arg0: i32) -> (i32, i32) {
    %c0_i32 = arith.constant 0 : i32
    %c0_i32_0 = arith.constant 0 : i32
    %c0_i32_1 = arith.constant 0 : i32
    return %c0_i32, %c0_i32_0 : i32, i32
  }
  func.func @transform_7(%arg0: i32) -> (i32, i32) {
    %c0_i32 = arith.constant 0 : i32
    %c0_i32_0 = arith.constant 0 : i32
    %c0_i32_1 = arith.constant 0 : i32
    return %c0_i32, %c0_i32_0 : i32, i32
  }
  func.func @transform_8(%arg0: i32) -> (i32, i32) {
    %c0_i32 = arith.constant 0 : i32
    %c0_i32_0 = arith.constant 0 : i32
    %c0_i32_1 = arith.constant 0 : i32
    return %c0_i32, %c0_i32_0 : i32, i32
  }
  func.func @transform_9(%arg0: i32) -> (i32, i32) {
    %c0_i32 = arith.constant 0 : i32
    %c0_i32_0 = arith.constant 0 : i32
    %c0_i32_1 = arith.constant 0 : i32
    return %c0_i32, %c0_i32_0 : i32, i32
  }
  func.func @transform_10(%arg0: i32) -> (i32, i32) {
    %c0_i32 = arith.constant 0 : i32
    %c0_i32_0 = arith.constant 0 : i32
    %c0_i32_1 = arith.constant 0 : i32
    return %c0_i32, %c0_i32_0 : i32, i32
  }
  func.func @transform_11(%arg0: i32) -> (i32, i32) {
    %c0_i32 = arith.constant 0 : i32
    %c0_i32_0 = arith.constant 0 : i32
    %c0_i32_1 = arith.constant 0 : i32
    return %c0_i32, %c0_i32_0 : i32, i32
  }
  func.func @transform_12(%arg0: i32) -> (i32, i32) {
    %c0_i32 = arith.constant 0 : i32
    %c0_i32_0 = arith.constant 0 : i32
    return %arg0, %c0_i32 : i32, i32
  }
}

</mosaic_0001>

<llo_original>
// kernel: tpu_custom_call.1
$region0: #{tpu_custom_call.1}
  #allocation0 [shape = 'u32[]', space=smem, size = 0x4, offset = 0x4, fixed_abs, tag = 'smem constant byte address 0x4 - core index']
  #allocation1 [shape = 'u32[144,128]{1,0:T(1,128)}', space=vmem, size = 0x12000, scoped, tag = 'internal scratch']
  %s0 = inlined_call_operand.hbm [shape: bf16[16,128], index: 0, kind: input, shape index: {}]
  %s1 = inlined_call_operand.hbm [shape: bf16[16,8], index: 1, kind: input, shape index: {}]
  %s2 = inlined_call_operand.hbm [shape: bf16[8,128], index: 2, kind: input, shape index: {}]
  %s3 = inlined_call_operand.hbm [shape: f32[1,128], index: 3, kind: input, shape index: {}]
  %s4 = inlined_call_operand.hbm [shape: bf16[128,128], index: 4, kind: input, shape index: {}]
  %s5 = inlined_call_operand.hbm [shape: f32[1,128], index: 5, kind: input, shape index: {}]
  %s6 = inlined_call_operand.hbm [shape: bf16[128,128], index: 6, kind: input, shape index: {}]
  %s7 = inlined_call_operand.hbm [shape: f32[1,128], index: 7, kind: input, shape index: {}]
  %s8 = inlined_call_operand.hbm [shape: bf16[128,128], index: 8, kind: input, shape index: {}]
  %s9 = inlined_call_operand.hbm [shape: f32[1,128], index: 9, kind: input, shape index: {}]
  %s10 = inlined_call_operand.hbm [shape: bf16[128,128], index: 10, kind: input, shape index: {}]
  %s11 = inlined_call_operand.hbm [shape: f32[1,128], index: 11, kind: input, shape index: {}]
  %s12 = inlined_call_operand.hbm [shape: f32[16,128], index: 12, kind: output, shape index: {}]
  %s13 = sld [smem:[#allocation0]]
  $region106: #{tpu_custom_call.1} parent=0
    _
  %s15 = ssub.s32 1, %s13
  %s16 = scalar_select 0, %s15, %s13
  $region1: #{tpu_custom_call.1} parent=0
    #allocation2 [shape = 'u8[4096]{0}', space=vmem, size = 0x1000, scoped, tag = 'input window, operand 0, single buffered']
    #allocation3 [shape = 's32[1]{0}', space=sflag, size = 0x4, scoped, tag = 'scoped memory for tpu_custom_call.1']
    #allocation4 [shape = 's32[1]{0}', space=sflag, size = 0x4, scoped, tag = 'scoped memory for tpu_custom_call.1']
    #allocation5 [shape = 'u8[4096]{0}', space=vmem, size = 0x1000, scoped, tag = 'input window, operand 1, single buffered']
    #allocation6 [shape = 's32[1]{0}', space=sflag, size = 0x4, scoped, tag = 'scoped memory for tpu_custom_call.1']
    #allocation7 [shape = 'u8[2048]{0}', space=vmem, size = 0x800, scoped, tag = 'input window, operand 2, single buffered']
    #allocation8 [shape = 'u8[512]{0}', space=vmem, size = 0x400, scoped, tag = 'input window, operand 3, single buffered']
    #allocation9 [shape = 's32[1]{0}', space=sflag, size = 0x4, scoped, tag = 'scoped memory for tpu_custom_call.1']
    #allocation10 [shape = 'u8[32768]{0}', space=vmem, size = 0x8000, scoped, tag = 'input window, operand 4, single buffered']
    #allocation11 [shape = 'u8[512]{0}', space=vmem, size = 0x400, scoped, tag = 'input window, operand 5, single buffered']
    #allocation12 [shape = 's32[1]{0}', space=sflag, size = 0x4, scoped, tag = 'scoped memory for tpu_custom_call.1']
    #allocation13 [shape = 'u8[32768]{0}', space=vmem, size = 0x8000, scoped, tag = 'input window, operand 6, single buffered']
    #allocation14 [shape = 'u8[512]{0}', space=vmem, size = 0x400, scoped, tag = 'input window, operand 7, single buffered']
    #allocation15 [shape = 's32[1]{0}', space=sflag, size = 0x4, scoped, tag = 'scoped memory for tpu_custom_call.1']
    #allocation16 [shape = 'u8[32768]{0}', space=vmem, size = 0x8000, scoped, tag = 'input window, operand 8, single buffered']
    #allocation17 [shape = 'u8[512]{0}', space=vmem, size = 0x400, scoped, tag = 'input window, operand 9, single buffered']
    #allocation18 [shape = 's32[1]{0}', space=sflag, size = 0x4, scoped, tag = 'scoped memory for tpu_custom_call.1']
    #allocation19 [shape = 'u8[32768]{0}', space=vmem, size = 0x8000, scoped, tag = 'input window, operand 10, single buffered']
    #allocation20 [shape = 'u8[512]{0}', space=vmem, size = 0x400, scoped, tag = 'input window, operand 11, single buffered']
    #allocation21 [shape = 's32[1]{0}', space=sflag, size = 0x4, scoped, tag = 'scoped memory for tpu_custom_call.1']
    #allocation22 [shape = 'u8[8192]{0}', space=vmem, size = 0x2000, scoped, tag = 'output window, operand 0, single buffered']
    %17 = vsyncpa [#allocation3], 0
    %18 = vsyncpa [#allocation6], 0
    %19 = vsyncpa [#allocation9], 0
    %20 = vsyncpa [#allocation12], 0
    %21 = vsyncpa [#allocation15], 0
    %22 = vsyncpa [#allocation18], 0
    %23 = vsyncpa [#allocation21], 0
    %24 = vsyncpa [#allocation4], 0
    // Predicated region
    $region2: #{tpu_custom_call.1} parent=1 // pred_check
      _
    $region3: #{tpu_custom_call.1} parent=1 // pred_check_branch
      %26 = sbr.rel (0) target = $region5
    $region4: #{tpu_custom_call.1} parent=1 // pred_region
      %s28 = ssub.s32 128, 128
      %29 = vsyncadd [#allocation3], %s28
      %s30 = sshll.u32 [#allocation2], 4
      %s31 = int_to_ptr.vmem [resolvable:$true] %s30
      %36 = dma.hbm_to_vmem [thread:$0]  %s0, 128, %s31, [#allocation3], 64, 64, 4
    $region5: #{tpu_custom_call.1} parent=1 // pred_fallthru
      _
    // Predicated region
    $region6: #{tpu_custom_call.1} parent=1 // pred_check
      _
    $region7: #{tpu_custom_call.1} parent=1 // pred_check_branch
      %38 = sbr.rel (0) target = $region9
    $region8: #{tpu_custom_call.1} parent=1 // pred_region
      %s40 = ssub.s32 128, 128
      %41 = vsyncadd [#allocation6], %s40
      %s42 = sshll.u32 [#allocation5], 4
      %s43 = int_to_ptr.vmem [resolvable:$true] %s42
      %48 = dma.hbm_to_vmem [thread:$0]  %s1, 128, %s43, [#allocation6], 64, 64, 4
    $region9: #{tpu_custom_call.1} parent=1 // pred_fallthru
      _
    // Predicated region
    $region10: #{tpu_custom_call.1} parent=1 // pred_check
      _
    $region11: #{tpu_custom_call.1} parent=1 // pred_check_branch
      %50 = sbr.rel (0) target = $region13
    $region12: #{tpu_custom_call.1} parent=1 // pred_region
      %s52 = ssub.s32 64, 64
      %53 = vsyncadd [#allocation6], %s52
      %s55 = sshll.u32 [#allocation7], 4
      %s56 = int_to_ptr.vmem [resolvable:$true] %s55
      %58 = dma.hbm_to_vmem [thread:$0]  %s2, 64, %s56, [#allocation6]
    $region13: #{tpu_custom_call.1} parent=1 // pred_fallthru
      _
    // Predicated region
    $region14: #{tpu_custom_call.1} parent=1 // pred_check
      _
    $region15: #{tpu_custom_call.1} parent=1 // pred_check_branch
      %60 = sbr.rel (0) target = $region17
    $region16: #{tpu_custom_call.1} parent=1 // pred_region
      %s62 = ssub.s32 16, 16
      %63 = vsyncadd [#allocation9], %s62
      %s65 = sshll.u32 [#allocation8], 4
      %s66 = int_to_ptr.vmem [resolvable:$true] %s65
      %68 = dma.hbm_to_vmem [thread:$0]  %s3, 16, %s66, [#allocation9]
    $region17: #{tpu_custom_call.1} parent=1 // pred_fallthru
      _
    // Predicated region
    $region18: #{tpu_custom_call.1} parent=1 // pred_check
      _
    $region19: #{tpu_custom_call.1} parent=1 // pred_check_branch
      %70 = sbr.rel (0) target = $region21
    $region20: #{tpu_custom_call.1} parent=1 // pred_region
      %s72 = ssub.s32 1024, 1024
      %73 = vsyncadd [#allocation9], %s72
      %s74 = sshll.u32 [#allocation10], 4
      %s75 = int_to_ptr.vmem [resolvable:$true] %s74
      %80 = dma.hbm_to_vmem [thread:$0]  %s4, 1024, %s75, [#allocation9], 64, 64, 4
    $region21: #{tpu_custom_call.1} parent=1 // pred_fallthru
      _
    // Predicated region
    $region22: #{tpu_custom_call.1} parent=1 // pred_check
      _
    $region23: #{tpu_custom_call.1} parent=1 // pred_check_branch
      %82 = sbr.rel (0) target = $region25
    $region24: #{tpu_custom_call.1} parent=1 // pred_region
      %s84 = ssub.s32 16, 16
      %85 = vsyncadd [#allocation12], %s84
      %s87 = sshll.u32 [#allocation11], 4
      %s88 = int_to_ptr.vmem [resolvable:$true] %s87
      %90 = dma.hbm_to_vmem [thread:$0]  %s5, 16, %s88, [#allocation12]
    $region25: #{tpu_custom_call.1} parent=1 // pred_fallthru
      _
    // Predicated region
    $region26: #{tpu_custom_call.1} parent=1 // pred_check
      _
    $region27: #{tpu_custom_call.1} parent=1 // pred_check_branch
      %92 = sbr.rel (0) target = $region29
    $region28: #{tpu_custom_call.1} parent=1 // pred_region
      %s94 = ssub.s32 1024, 1024
      %95 = vsyncadd [#allocation12], %s94
      %s96 = sshll.u32 [#allocation13], 4
      %s97 = int_to_ptr.vmem [resolvable:$true] %s96
      %102 = dma.hbm_to_vmem [thread:$0]  %s6, 1024, %s97, [#allocation12], 64, 64, 4
    $region29: #{tpu_custom_call.1} parent=1 // pred_fallthru
      _
    // Predicated region
    $region30: #{tpu_custom_call.1} parent=1 // pred_check
      _
    $region31: #{tpu_custom_call.1} parent=1 // pred_check_branch
      %104 = sbr.rel (0) target = $region33
    $region32: #{tpu_custom_call.1} parent=1 // pred_region
      %s106 = ssub.s32 16, 16
      %107 = vsyncadd [#allocation15], %s106
      %s109 = sshll.u32 [#allocation14], 4
      %s110 = int_to_ptr.vmem [resolvable:$true] %s109
      %112 = dma.hbm_to_vmem [thread:$0]  %s7, 16, %s110, [#allocation15]
    $region33: #{tpu_custom_call.1} parent=1 // pred_fallthru
      _
    // Predicated region
    $region34: #{tpu_custom_call.1} parent=1 // pred_check
      _
    $region35: #{tpu_custom_call.1} parent=1 // pred_check_branch
      %114 = sbr.rel (0) target = $region37
    $region36: #{tpu_custom_call.1} parent=1 // pred_region
      %s116 = ssub.s32 1024, 1024
      %117 = vsyncadd [#allocation15], %s116
      %s118 = sshll.u32 [#allocation16], 4
      %s119 = int_to_ptr.vmem [resolvable:$true] %s118
      %124 = dma.hbm_to_vmem [thread:$0]  %s8, 1024, %s119, [#allocation15], 64, 64, 4
    $region37: #{tpu_custom_call.1} parent=1 // pred_fallthru
      _
    // Predicated region
    $region38: #{tpu_custom_call.1} parent=1 // pred_check
      _
    $region39: #{tpu_custom_call.1} parent=1 // pred_check_branch
      %126 = sbr.rel (0) target = $region41
    $region40: #{tpu_custom_call.1} parent=1 // pred_region
      %s128 = ssub.s32 16, 16
      %129 = vsyncadd [#allocation18], %s128
      %s131 = sshll.u32 [#allocation17], 4
      %s132 = int_to_ptr.vmem [resolvable:$true] %s131
      %134 = dma.hbm_to_vmem [thread:$0]  %s9, 16, %s132, [#allocation18]
    $region41: #{tpu_custom_call.1} parent=1 // pred_fallthru
      _
    // Predicated region
    $region42: #{tpu_custom_call.1} parent=1 // pred_check
      _
    $region43: #{tpu_custom_call.1} parent=1 // pred_check_branch
      %136 = sbr.rel (0) target = $region45
    $region44: #{tpu_custom_call.1} parent=1 // pred_region
      %s138 = ssub.s32 1024, 1024
      %139 = vsyncadd [#allocation18], %s138
      %s140 = sshll.u32 [#allocation19], 4
      %s141 = int_to_ptr.vmem [resolvable:$true] %s140
      %146 = dma.hbm_to_vmem [thread:$0]  %s10, 1024, %s141, [#allocation18], 64, 64, 4
    $region45: #{tpu_custom_call.1} parent=1 // pred_fallthru
      _
    // Predicated region
    $region46: #{tpu_custom_call.1} parent=1 // pred_check
      _
    $region47: #{tpu_custom_call.1} parent=1 // pred_check_branch
      %148 = sbr.rel (0) target = $region49
    $region48: #{tpu_custom_call.1} parent=1 // pred_region
      %s150 = ssub.s32 16, 16
      %151 = vsyncadd [#allocation21], %s150
      %s153 = sshll.u32 [#allocation20], 4
      %s154 = int_to_ptr.vmem [resolvable:$true] %s153
      %156 = dma.hbm_to_vmem [thread:$0]  %s11, 16, %s154, [#allocation21]
    $region49: #{tpu_custom_call.1} parent=1 // pred_fallthru
      _
    // Predicated region
    $region50: #{tpu_custom_call.1} parent=1 // pred_check
      _
    $region51: #{tpu_custom_call.1} parent=1 // pred_check_branch
      %158 = sbr.rel (0) target = $region53
    $region52: #{tpu_custom_call.1} parent=1 // pred_region
      %159 = dma.done [#allocation3], 128
    $region53: #{tpu_custom_call.1} parent=1 // pred_fallthru
      _
    // Predicated region
    $region54: #{tpu_custom_call.1} parent=1 // pred_check
      _
    $region55: #{tpu_custom_call.1} parent=1 // pred_check_branch
      %161 = sbr.rel (0) target = $region57
    $region56: #{tpu_custom_call.1} parent=1 // pred_region
      %162 = dma.done [#allocation6], 128
    $region57: #{tpu_custom_call.1} parent=1 // pred_fallthru
      _
    // Predicated region
    $region58: #{tpu_custom_call.1} parent=1 // pred_check
      _
    $region59: #{tpu_custom_call.1} parent=1 // pred_check_branch
      %164 = sbr.rel (0) target = $region61
    $region60: #{tpu_custom_call.1} parent=1 // pred_region
      %165 = dma.done [#allocation6], 64
    $region61: #{tpu_custom_call.1} parent=1 // pred_fallthru
      _
    // Predicated region
    $region62: #{tpu_custom_call.1} parent=1 // pred_check
      _
    $region63: #{tpu_custom_call.1} parent=1 // pred_check_branch
      %167 = sbr.rel (0) target = $region65
    $region64: #{tpu_custom_call.1} parent=1 // pred_region
      %168 = dma.done [#allocation9], 16
    $region65: #{tpu_custom_call.1} parent=1 // pred_fallthru
      _
    // Predicated region
    $region66: #{tpu_custom_call.1} parent=1 // pred_check
      _
    $region67: #{tpu_custom_call.1} parent=1 // pred_check_branch
      %170 = sbr.rel (0) target = $region69
    $region68: #{tpu_custom_call.1} parent=1 // pred_region
      %171 = dma.done [#allocation9], 1024
    $region69: #{tpu_custom_call.1} parent=1 // pred_fallthru
      _
    // Predicated region
    $region70: #{tpu_custom_call.1} parent=1 // pred_check
      _
    $region71: #{tpu_custom_call.1} parent=1 // pred_check_branch
      %173 = sbr.rel (0) target = $region73
    $region72: #{tpu_custom_call.1} parent=1 // pred_region
      %174 = dma.done [#allocation12], 16
    $region73: #{tpu_custom_call.1} parent=1 // pred_fallthru
      _
    // Predicated region
    $region74: #{tpu_custom_call.1} parent=1 // pred_check
      _
    $region75: #{tpu_custom_call.1} parent=1 // pred_check_branch
      %176 = sbr.rel (0) target = $region77
    $region76: #{tpu_custom_call.1} parent=1 // pred_region
      %177 = dma.done [#allocation12], 1024
    $region77: #{tpu_custom_call.1} parent=1 // pred_fallthru
      _
    // Predicated region
    $region78: #{tpu_custom_call.1} parent=1 // pred_check
      _
    $region79: #{tpu_custom_call.1} parent=1 // pred_check_branch
      %179 = sbr.rel (0) target = $region81
    $region80: #{tpu_custom_call.1} parent=1 // pred_region
      %180 = dma.done [#allocation15], 16
    $region81: #{tpu_custom_call.1} parent=1 // pred_fallthru
      _
    // Predicated region
    $region82: #{tpu_custom_call.1} parent=1 // pred_check
      _
    $region83: #{tpu_custom_call.1} parent=1 // pred_check_branch
      %182 = sbr.rel (0) target = $region85
    $region84: #{tpu_custom_call.1} parent=1 // pred_region
      %183 = dma.done [#allocation15], 1024
    $region85: #{tpu_custom_call.1} parent=1 // pred_fallthru
      _
    // Predicated region
    $region86: #{tpu_custom_call.1} parent=1 // pred_check
      _
    $region87: #{tpu_custom_call.1} parent=1 // pred_check_branch
      %185 = sbr.rel (0) target = $region89
    $region88: #{tpu_custom_call.1} parent=1 // pred_region
      %186 = dma.done [#allocation18], 16
    $region89: #{tpu_custom_call.1} parent=1 // pred_fallthru
      _
    // Predicated region
    $region90: #{tpu_custom_call.1} parent=1 // pred_check
      _
    $region91: #{tpu_custom_call.1} parent=1 // pred_check_branch
      %188 = sbr.rel (0) target = $region93
    $region92: #{tpu_custom_call.1} parent=1 // pred_region
      %189 = dma.done [#allocation18], 1024
    $region93: #{tpu_custom_call.1} parent=1 // pred_fallthru
      _
    // Predicated region
    $region94: #{tpu_custom_call.1} parent=1 // pred_check
      _
    $region95: #{tpu_custom_call.1} parent=1 // pred_check_branch
      %191 = sbr.rel (0) target = $region97
    $region96: #{tpu_custom_call.1} parent=1 // pred_region
      %192 = dma.done [#allocation21], 16
    $region97: #{tpu_custom_call.1} parent=1 // pred_fallthru
      _
    %v194 = vld [vmem:[#allocation5] sm:$0xf]
    %v195 = vld [vmem:[#allocation5 + $0x4] sm:$0xf]
    %v196 = vld [vmem:[#allocation7] sm:$0xf]
    %v197 = vld [vmem:[#allocation8] sm:$0x1]
    %v199 = vlaneseq
    %v200 = vshrl.u32 %v199, 7
    %v201 = vsub.s32 0, %v200
    %v202 = vrot.slane %v197, %v201
    %v206 = vunpack.c.l.b16 %v194
    %v207 = vunpack.c.l.b16 %v195
    %v208 = vpack.c.b16 %v207, %v206
    %vm209 = vcmask 64512
    %v211 = vsel %vm209, %v208, 0
    %vm213 = vcmask 1043456
    %v215 = vsel %vm213, %v196, 0
    %217 = vmatprep.subr.bf16.mxu0 0
    %218 = vmatpush1.bf16.msra.mxu0 %v215
    %219 = vmatprep.subr.bf16.mxu0 0
    %220 = vmatpush1.bf16.msra.mxu0 0
    %221 = vmatprep.subr.bf16.mxu0 0
    %222 = vmatpush1.bf16.msra.mxu0 0
    %223 = vmatprep.subr.bf16.mxu0 0
    %224 = vmatpush1.bf16.msra.mxu0 0
    %225 = vmatprep.subr.bf16.mxu0 0
    %226 = vmatpush1.bf16.msra.mxu0 0
    %227 = vmatprep.subr.bf16.mxu0 0
    %228 = vmatpush1.bf16.msra.mxu0 0
    %229 = vmatprep.subr.bf16.mxu0 0
    %230 = vmatpush1.bf16.msra.mxu0 0
    %231 = vmatprep.subr.bf16.mxu0 0
    %232 = vmatpush1.bf16.msra.mxu0 0
    %233 = vmatprep.subr.bf16.mxu0 0
    %234 = vmatpush1.bf16.msra.mxu0 0
    %235 = vmatprep.subr.bf16.mxu0 0
    %236 = vmatpush1.bf16.msra.mxu0 0
    %237 = vmatprep.subr.bf16.mxu0 0
    %238 = vmatpush1.bf16.msra.mxu0 0
    %239 = vmatprep.subr.bf16.mxu0 0
    %240 = vmatpush1.bf16.msra.mxu0 0
    %241 = vmatprep.subr.bf16.mxu0 0
    %242 = vmatpush1.bf16.msra.mxu0 0
    %243 = vmatprep.subr.bf16.mxu0 0
    %244 = vmatpush1.bf16.msra.mxu0 0
    %245 = vmatprep.subr.bf16.mxu0 0
    %246 = vmatpush1.bf16.msra.mxu0 0
    %247 = vmatprep.subr.bf16.mxu0 0
    %248 = vmatpush1.bf16.msra.mxu0 0
    %249 = vmatprep.mubr.bf16.mxu0 0
    %250 = vmatmul.mubr.bf16.gmra.mrb[0].mxu0 %v211
    %v251 = vpop.f32.mrb[0].mxu0
    %v252 = vadd.f32 %v202, %v251
    %v253 = vpop.f32.mrb[0].mxu0
    %v254 = vpop.f32.mrb[0].mxu0
    %v255 = vadd.f32 %v202, %v254
    %v256 = vpop.f32.mrb[0].mxu0
    %257 = vdwg.mxu0
    %v258 = vtanh.pop %v252
    %v259 = vtanh.pop %v255
    %v260 = vpack.c.bf16 %v259, %v258
    %v261 = vld [vmem:[#allocation10] sm:$0xf]
    %v262 = vld [vmem:[#allocation10 + $0x4] sm:$0xf]
    %v263 = vld [vmem:[#allocation10 + $0x8] sm:$0xf]
    %v264 = vld [vmem:[#allocation10 + $0xc] sm:$0xf]
    %v265 = vld [vmem:[#allocation10 + $0x10] sm:$0xf]
    %v266 = vld [vmem:[#allocation10 + $0x14] sm:$0xf]
    %v267 = vld [vmem:[#allocation10 + $0x18] sm:$0xf]
    %v268 = vld [vmem:[#allocation10 + $0x1c] sm:$0xf]
    %v269 = vld [vmem:[#allocation10 + $0x20] sm:$0xf]
    %v270 = vld [vmem:[#allocation10 + $0x24] sm:$0xf]
    %v271 = vld [vmem:[#allocation10 + $0x28] sm:$0xf]
    %v272 = vld [vmem:[#allocation10 + $0x2c] sm:$0xf]
    %v273 = vld [vmem:[#allocation10 + $0x30] sm:$0xf]
    %v274 = vld [vmem:[#allocation10 + $0x34] sm:$0xf]
    %v275 = vld [vmem:[#allocation10 + $0x38] sm:$0xf]
    %v276 = vld [vmem:[#allocation10 + $0x3c] sm:$0xf]
    %v277 = vld [vmem:[#allocation11] sm:$0x1]
    %v279 = vlaneseq
    %v280 = vshrl.u32 %v279, 7
    %v281 = vsub.s32 0, %v280
    %v282 = vrot.slane %v277, %v281
    %v300 = vunpack.c.l.b16 %v261
    %v301 = vunpack.c.l.b16 %v262
    %v302 = vunpack.c.l.b16 %v263
    %v303 = vunpack.c.l.b16 %v264
    %v304 = vunpack.c.l.b16 %v265
    %v305 = vunpack.c.l.b16 %v266
    %v306 = vunpack.c.l.b16 %v267
    %v307 = vunpack.c.l.b16 %v268
    %v308 = vunpack.c.l.b16 %v269
    %v309 = vunpack.c.l.b16 %v270
    %v310 = vunpack.c.l.b16 %v271
    %v311 = vunpack.c.l.b16 %v272
    %v312 = vunpack.c.l.b16 %v273
    %v313 = vunpack.c.l.b16 %v274
    %v314 = vunpack.c.l.b16 %v275
    %v315 = vunpack.c.l.b16 %v276
    %v316 = vpack.c.b16 %v301, %v300
    %v317 = vpack.c.b16 %v303, %v302
    %v318 = vpack.c.b16 %v305, %v304
    %v319 = vpack.c.b16 %v307, %v306
    %v320 = vpack.c.b16 %v309, %v308
    %v321 = vpack.c.b16 %v311, %v310
    %v322 = vpack.c.b16 %v313, %v312
    %v323 = vpack.c.b16 %v315, %v314
    %332 = vmatprep.subr.bf16.mxu0 0
    %333 = vmatpush1.bf16.msra.mxu0 %v316
    %334 = vmatprep.subr.bf16.mxu0 0
    %335 = vmatpush1.bf16.msra.mxu0 %v317
    %336 = vmatprep.subr.bf16.mxu0 0
    %337 = vmatpush1.bf16.msra.mxu0 %v318
    %338 = vmatprep.subr.bf16.mxu0 0
    %339 = vmatpush1.bf16.msra.mxu0 %v319
    %340 = vmatprep.subr.bf16.mxu0 0
    %341 = vmatpush1.bf16.msra.mxu0 %v320
    %342 = vmatprep.subr.bf16.mxu0 0
    %343 = vmatpush1.bf16.msra.mxu0 %v321
    %344 = vmatprep.subr.bf16.mxu0 0
    %345 = vmatpush1.bf16.msra.mxu0 %v322
    %346 = vmatprep.subr.bf16.mxu0 0
    %347 = vmatpush1.bf16.msra.mxu0 %v323
    %348 = vmatprep.subr.bf16.mxu0 0
    %349 = vmatpush1.bf16.msra.mxu0 0
    %350 = vmatprep.subr.bf16.mxu0 0
    %351 = vmatpush1.bf16.msra.mxu0 0
    %352 = vmatprep.subr.bf16.mxu0 0
    %353 = vmatpush1.bf16.msra.mxu0 0
    %354 = vmatprep.subr.bf16.mxu0 0
    %355 = vmatpush1.bf16.msra.mxu0 0
    %356 = vmatprep.subr.bf16.mxu0 0
    %357 = vmatpush1.bf16.msra.mxu0 0
    %358 = vmatprep.subr.bf16.mxu0 0
    %359 = vmatpush1.bf16.msra.mxu0 0
    %360 = vmatprep.subr.bf16.mxu0 0
    %361 = vmatpush1.bf16.msra.mxu0 0
    %362 = vmatprep.subr.bf16.mxu0 0
    %363 = vmatpush1.bf16.msra.mxu0 0
    %364 = vmatprep.mubr.bf16.mxu0 0
    %365 = vmatmul.mubr.bf16.gmra.mrb[0].mxu0 %v260
    %v366 = vpop.f32.mrb[0].mxu0
    %v367 = vadd.f32 %v282, %v366
    %v368 = vpop.f32.mrb[0].mxu0
    %v369 = vpop.f32.mrb[0].mxu0
    %v370 = vadd.f32 %v282, %v369
    %v371 = vpop.f32.mrb[0].mxu0
    %372 = vdwg.mxu0
    %v373 = vtanh.pop %v367
    %v374 = vtanh.pop %v370
    %v375 = vpack.c.bf16 %v374, %v373
    %v376 = vld [vmem:[#allocation13] sm:$0xf]
    %v377 = vld [vmem:[#allocation13 + $0x4] sm:$0xf]
    %v378 = vld [vmem:[#allocation13 + $0x8] sm:$0xf]
    %v379 = vld [vmem:[#allocation13 + $0xc] sm:$0xf]
    %v380 = vld [vmem:[#allocation13 + $0x10] sm:$0xf]
    %v381 = vld [vmem:[#allocation13 + $0x14] sm:$0xf]
    %v382 = vld [vmem:[#allocation13 + $0x18] sm:$0xf]
    %v383 = vld [vmem:[#allocation13 + $0x1c] sm:$0xf]
    %v384 = vld [vmem:[#allocation13 + $0x20] sm:$0xf]
    %v385 = vld [vmem:[#allocation13 + $0x24] sm:$0xf]
    %v386 = vld [vmem:[#allocation13 + $0x28] sm:$0xf]
    %v387 = vld [vmem:[#allocation13 + $0x2c] sm:$0xf]
    %v388 = vld [vmem:[#allocation13 + $0x30] sm:$0xf]
    %v389 = vld [vmem:[#allocation13 + $0x34] sm:$0xf]
    %v390 = vld [vmem:[#allocation13 + $0x38] sm:$0xf]
    %v391 = vld [vmem:[#allocation13 + $0x3c] sm:$0xf]
    %v392 = vld [vmem:[#allocation14] sm:$0x1]
    %v394 = vlaneseq
    %v395 = vshrl.u32 %v394, 7
    %v396 = vsub.s32 0, %v395
    %v397 = vrot.slane %v392, %v396
    %v415 = vunpack.c.l.b16 %v376
    %v416 = vunpack.c.l.b16 %v377
    %v417 = vunpack.c.l.b16 %v378
    %v418 = vunpack.c.l.b16 %v379
    %v419 = vunpack.c.l.b16 %v380
    %v420 = vunpack.c.l.b16 %v381
    %v421 = vunpack.c.l.b16 %v382
    %v422 = vunpack.c.l.b16 %v383
    %v423 = vunpack.c.l.b16 %v384
    %v424 = vunpack.c.l.b16 %v385
    %v425 = vunpack.c.l.b16 %v386
    %v426 = vunpack.c.l.b16 %v387
    %v427 = vunpack.c.l.b16 %v388
    %v428 = vunpack.c.l.b16 %v389
    %v429 = vunpack.c.l.b16 %v390
    %v430 = vunpack.c.l.b16 %v391
    %v431 = vpack.c.b16 %v416, %v415
    %v432 = vpack.c.b16 %v418, %v417
    %v433 = vpack.c.b16 %v420, %v419
    %v434 = vpack.c.b16 %v422, %v421
    %v435 = vpack.c.b16 %v424, %v423
    %v436 = vpack.c.b16 %v426, %v425
    %v437 = vpack.c.b16 %v428, %v427
    %v438 = vpack.c.b16 %v430, %v429
    %447 = vmatprep.subr.bf16.mxu0 0
    %448 = vmatpush1.bf16.msra.mxu0 %v431
    %449 = vmatprep.subr.bf16.mxu0 0
    %450 = vmatpush1.bf16.msra.mxu0 %v432
    %451 = vmatprep.subr.bf16.mxu0 0
    %452 = vmatpush1.bf16.msra.mxu0 %v433
    %453 = vmatprep.subr.bf16.mxu0 0
    %454 = vmatpush1.bf16.msra.mxu0 %v434
    %455 = vmatprep.subr.bf16.mxu0 0
    %456 = vmatpush1.bf16.msra.mxu0 %v435
    %457 = vmatprep.subr.bf16.mxu0 0
    %458 = vmatpush1.bf16.msra.mxu0 %v436
    %459 = vmatprep.subr.bf16.mxu0 0
    %460 = vmatpush1.bf16.msra.mxu0 %v437
    %461 = vmatprep.subr.bf16.mxu0 0
    %462 = vmatpush1.bf16.msra.mxu0 %v438
    %463 = vmatprep.subr.bf16.mxu0 0
    %464 = vmatpush1.bf16.msra.mxu0 0
    %465 = vmatprep.subr.bf16.mxu0 0
    %466 = vmatpush1.bf16.msra.mxu0 0
    %467 = vmatprep.subr.bf16.mxu0 0
    %468 = vmatpush1.bf16.msra.mxu0 0
    %469 = vmatprep.subr.bf16.mxu0 0
    %470 = vmatpush1.bf16.msra.mxu0 0
    %471 = vmatprep.subr.bf16.mxu0 0
    %472 = vmatpush1.bf16.msra.mxu0 0
    %473 = vmatprep.subr.bf16.mxu0 0
    %474 = vmatpush1.bf16.msra.mxu0 0
    %475 = vmatprep.subr.bf16.mxu0 0
    %476 = vmatpush1.bf16.msra.mxu0 0
    %477 = vmatprep.subr.bf16.mxu0 0
    %478 = vmatpush1.bf16.msra.mxu0 0
    %479 = vmatprep.mubr.bf16.mxu0 0
    %480 = vmatmul.mubr.bf16.gmra.mrb[0].mxu0 %v375
    %v481 = vpop.f32.mrb[0].mxu0
    %v482 = vadd.f32 %v397, %v481
    %v483 = vpop.f32.mrb[0].mxu0
    %v484 = vpop.f32.mrb[0].mxu0
    %v485 = vadd.f32 %v397, %v484
    %v486 = vpop.f32.mrb[0].mxu0
    %487 = vdwg.mxu0
    %v488 = vtanh.pop %v482
    %v489 = vtanh.pop %v485
    %v490 = vld [vmem:[#allocation2] sm:$0xf]
    %v491 = vld [vmem:[#allocation2 + $0x4] sm:$0xf]
    %v492 = vunpack.c.l.bf16 %v490
    %v493 = vunpack.c.l.bf16 %v491
    %v494 = vadd.f32 %v492, %v488
    %v495 = vadd.f32 %v493, %v489
    %v496 = vpack.c.bf16 %v495, %v494
    %v497 = vld [vmem:[#allocation16] sm:$0xf]
    %v498 = vld [vmem:[#allocation16 + $0x4] sm:$0xf]
    %v499 = vld [vmem:[#allocation16 + $0x8] sm:$0xf]
    %v500 = vld [vmem:[#allocation16 + $0xc] sm:$0xf]
    %v501 = vld [vmem:[#allocation16 + $0x10] sm:$0xf]
    %v502 = vld [vmem:[#allocation16 + $0x14] sm:$0xf]
    %v503 = vld [vmem:[#allocation16 + $0x18] sm:$0xf]
    %v504 = vld [vmem:[#allocation16 + $0x1c] sm:$0xf]
    %v505 = vld [vmem:[#allocation16 + $0x20] sm:$0xf]
    %v506 = vld [vmem:[#allocation16 + $0x24] sm:$0xf]
    %v507 = vld [vmem:[#allocation16 + $0x28] sm:$0xf]
    %v508 = vld [vmem:[#allocation16 + $0x2c] sm:$0xf]
    %v509 = vld [vmem:[#allocation16 + $0x30] sm:$0xf]
    %v510 = vld [vmem:[#allocation16 + $0x34] sm:$0xf]
    %v511 = vld [vmem:[#allocation16 + $0x38] sm:$0xf]
    %v512 = vld [vmem:[#allocation16 + $0x3c] sm:$0xf]
    %v513 = vld [vmem:[#allocation17] sm:$0x1]
    %v515 = vlaneseq
    %v516 = vshrl.u32 %v515, 7
    %v517 = vsub.s32 0, %v516
    %v518 = vrot.slane %v513, %v517
    %v536 = vunpack.c.l.b16 %v497
    %v537 = vunpack.c.l.b16 %v498
    %v538 = vunpack.c.l.b16 %v499
    %v539 = vunpack.c.l.b16 %v500
    %v540 = vunpack.c.l.b16 %v501
    %v541 = vunpack.c.l.b16 %v502
    %v542 = vunpack.c.l.b16 %v503
    %v543 = vunpack.c.l.b16 %v504
    %v544 = vunpack.c.l.b16 %v505
    %v545 = vunpack.c.l.b16 %v506
    %v546 = vunpack.c.l.b16 %v507
    %v547 = vunpack.c.l.b16 %v508
    %v548 = vunpack.c.l.b16 %v509
    %v549 = vunpack.c.l.b16 %v510
    %v550 = vunpack.c.l.b16 %v511
    %v551 = vunpack.c.l.b16 %v512
    %v552 = vpack.c.b16 %v537, %v536
    %v553 = vpack.c.b16 %v539, %v538
    %v554 = vpack.c.b16 %v541, %v540
    %v555 = vpack.c.b16 %v543, %v542
    %v556 = vpack.c.b16 %v545, %v544
    %v557 = vpack.c.b16 %v547, %v546
    %v558 = vpack.c.b16 %v549, %v548
    %v559 = vpack.c.b16 %v551, %v550
    %568 = vmatprep.subr.bf16.mxu0 0
    %569 = vmatpush1.bf16.msra.mxu0 %v552
    %570 = vmatprep.subr.bf16.mxu0 0
    %571 = vmatpush1.bf16.msra.mxu0 %v553
    %572 = vmatprep.subr.bf16.mxu0 0
    %573 = vmatpush1.bf16.msra.mxu0 %v554
    %574 = vmatprep.subr.bf16.mxu0 0
    %575 = vmatpush1.bf16.msra.mxu0 %v555
    %576 = vmatprep.subr.bf16.mxu0 0
    %577 = vmatpush1.bf16.msra.mxu0 %v556
    %578 = vmatprep.subr.bf16.mxu0 0
    %579 = vmatpush1.bf16.msra.mxu0 %v557
    %580 = vmatprep.subr.bf16.mxu0 0
    %581 = vmatpush1.bf16.msra.mxu0 %v558
    %582 = vmatprep.subr.bf16.mxu0 0
    %583 = vmatpush1.bf16.msra.mxu0 %v559
    %584 = vmatprep.subr.bf16.mxu0 0
    %585 = vmatpush1.bf16.msra.mxu0 0
    %586 = vmatprep.subr.bf16.mxu0 0
    %587 = vmatpush1.bf16.msra.mxu0 0
    %588 = vmatprep.subr.bf16.mxu0 0
    %589 = vmatpush1.bf16.msra.mxu0 0
    %590 = vmatprep.subr.bf16.mxu0 0
    %591 = vmatpush1.bf16.msra.mxu0 0
    %592 = vmatprep.subr.bf16.mxu0 0
    %593 = vmatpush1.bf16.msra.mxu0 0
    %594 = vmatprep.subr.bf16.mxu0 0
    %595 = vmatpush1.bf16.msra.mxu0 0
    %596 = vmatprep.subr.bf16.mxu0 0
    %597 = vmatpush1.bf16.msra.mxu0 0
    %598 = vmatprep.subr.bf16.mxu0 0
    %599 = vmatpush1.bf16.msra.mxu0 0
    %600 = vmatprep.mubr.bf16.mxu0 0
    %601 = vmatmul.mubr.bf16.gmra.mrb[0].mxu0 %v496
    %v602 = vpop.f32.mrb[0].mxu0
    %v603 = vadd.f32 %v518, %v602
    %v604 = vpop.f32.mrb[0].mxu0
    %v605 = vpop.f32.mrb[0].mxu0
    %v606 = vadd.f32 %v518, %v605
    %v607 = vpop.f32.mrb[0].mxu0
    %608 = vdwg.mxu0
    %v609 = vmax.f32 %v603, 0.0
    %v610 = vmax.f32 %v606, 0.0
    %v611 = vpack.c.bf16 %v610, %v609
    %v612 = vld [vmem:[#allocation19] sm:$0xf]
    %v613 = vld [vmem:[#allocation19 + $0x4] sm:$0xf]
    %v614 = vld [vmem:[#allocation19 + $0x8] sm:$0xf]
    %v615 = vld [vmem:[#allocation19 + $0xc] sm:$0xf]
    %v616 = vld [vmem:[#allocation19 + $0x10] sm:$0xf]
    %v617 = vld [vmem:[#allocation19 + $0x14] sm:$0xf]
    %v618 = vld [vmem:[#allocation19 + $0x18] sm:$0xf]
    %v619 = vld [vmem:[#allocation19 + $0x1c] sm:$0xf]
    %v620 = vld [vmem:[#allocation19 + $0x20] sm:$0xf]
    %v621 = vld [vmem:[#allocation19 + $0x24] sm:$0xf]
    %v622 = vld [vmem:[#allocation19 + $0x28] sm:$0xf]
    %v623 = vld [vmem:[#allocation19 + $0x2c] sm:$0xf]
    %v624 = vld [vmem:[#allocation19 + $0x30] sm:$0xf]
    %v625 = vld [vmem:[#allocation19 + $0x34] sm:$0xf]
    %v626 = vld [vmem:[#allocation19 + $0x38] sm:$0xf]
    %v627 = vld [vmem:[#allocation19 + $0x3c] sm:$0xf]
    %v628 = vld [vmem:[#allocation20] sm:$0x1]
    %v630 = vlaneseq
    %v631 = vshrl.u32 %v630, 7
    %v632 = vsub.s32 0, %v631
    %v633 = vrot.slane %v628, %v632
    %v651 = vunpack.c.l.b16 %v612
    %v652 = vunpack.c.l.b16 %v613
    %v653 = vunpack.c.l.b16 %v614
    %v654 = vunpack.c.l.b16 %v615
    %v655 = vunpack.c.l.b16 %v616
    %v656 = vunpack.c.l.b16 %v617
    %v657 = vunpack.c.l.b16 %v618
    %v658 = vunpack.c.l.b16 %v619
    %v659 = vunpack.c.l.b16 %v620
    %v660 = vunpack.c.l.b16 %v621
    %v661 = vunpack.c.l.b16 %v622
    %v662 = vunpack.c.l.b16 %v623
    %v663 = vunpack.c.l.b16 %v624
    %v664 = vunpack.c.l.b16 %v625
    %v665 = vunpack.c.l.b16 %v626
    %v666 = vunpack.c.l.b16 %v627
    %v667 = vpack.c.b16 %v652, %v651
    %v668 = vpack.c.b16 %v654, %v653
    %v669 = vpack.c.b16 %v656, %v655
    %v670 = vpack.c.b16 %v658, %v657
    %v671 = vpack.c.b16 %v660, %v659
    %v672 = vpack.c.b16 %v662, %v661
    %v673 = vpack.c.b16 %v664, %v663
    %v674 = vpack.c.b16 %v666, %v665
    %683 = vmatprep.subr.bf16.mxu0 0
    %684 = vmatpush1.bf16.msra.mxu0 %v667
    %685 = vmatprep.subr.bf16.mxu0 0
    %686 = vmatpush1.bf16.msra.mxu0 %v668
    %687 = vmatprep.subr.bf16.mxu0 0
    %688 = vmatpush1.bf16.msra.mxu0 %v669
    %689 = vmatprep.subr.bf16.mxu0 0
    %690 = vmatpush1.bf16.msra.mxu0 %v670
    %691 = vmatprep.subr.bf16.mxu0 0
    %692 = vmatpush1.bf16.msra.mxu0 %v671
    %693 = vmatprep.subr.bf16.mxu0 0
    %694 = vmatpush1.bf16.msra.mxu0 %v672
    %695 = vmatprep.subr.bf16.mxu0 0
    %696 = vmatpush1.bf16.msra.mxu0 %v673
    %697 = vmatprep.subr.bf16.mxu0 0
    %698 = vmatpush1.bf16.msra.mxu0 %v674
    %699 = vmatprep.subr.bf16.mxu0 0
    %700 = vmatpush1.bf16.msra.mxu0 0
    %701 = vmatprep.subr.bf16.mxu0 0
    %702 = vmatpush1.bf16.msra.mxu0 0
    %703 = vmatprep.subr.bf16.mxu0 0
    %704 = vmatpush1.bf16.msra.mxu0 0
    %705 = vmatprep.subr.bf16.mxu0 0
    %706 = vmatpush1.bf16.msra.mxu0 0
    %707 = vmatprep.subr.bf16.mxu0 0
    %708 = vmatpush1.bf16.msra.mxu0 0
    %709 = vmatprep.subr.bf16.mxu0 0
    %710 = vmatpush1.bf16.msra.mxu0 0
    %711 = vmatprep.subr.bf16.mxu0 0
    %712 = vmatpush1.bf16.msra.mxu0 0
    %713 = vmatprep.subr.bf16.mxu0 0
    %714 = vmatpush1.bf16.msra.mxu0 0
    %715 = vmatprep.mubr.bf16.mxu0 0
    %716 = vmatmul.mubr.bf16.gmra.mrb[0].mxu0 %v611
    %v717 = vpop.f32.mrb[0].mxu0
    %v718 = vadd.f32 %v633, %v717
    %v719 = vpop.f32.mrb[0].mxu0
    %v720 = vpop.f32.mrb[0].mxu0
    %v721 = vadd.f32 %v633, %v720
    %v722 = vpop.f32.mrb[0].mxu0
    %723 = vdwg.mxu0
    %724 = vst [vmem:[#allocation22] sm:$0xff] %v718
    %725 = vst [vmem:[#allocation22 + $0x8] sm:$0xff] %v721
    // Predicated region
    $region98: #{tpu_custom_call.1} parent=1 // pred_check
      _
    $region99: #{tpu_custom_call.1} parent=1 // pred_check_branch
      %727 = sbr.rel (0) target = $region101
    $region100: #{tpu_custom_call.1} parent=1 // pred_region
      %s729 = ssub.s32 256, 256
      %730 = vsyncadd [#allocation4], %s729
      %s731 = sshll.u32 [#allocation22], 4
      %s732 = int_to_ptr.vmem [resolvable:$true] %s731
      %737 = dma.vmem_to_hbm [thread:$0]  %s732, 256, %s12, [#allocation4], 128, 128, 8
    $region101: #{tpu_custom_call.1} parent=1 // pred_fallthru
      _
    // Predicated region
    $region102: #{tpu_custom_call.1} parent=1 // pred_check
      _
    $region103: #{tpu_custom_call.1} parent=1 // pred_check_branch
      %739 = sbr.rel (0) target = $region105
    $region104: #{tpu_custom_call.1} parent=1 // pred_region
      %740 = dma.done [#allocation4], 256
    $region105: #{tpu_custom_call.1} parent=1 // pred_fallthru
      _
    %741 = vsyncpa [#allocation3], 1
    %742 = vsyncpa [#allocation6], 1
    %743 = vsyncpa [#allocation9], 1
    %744 = vsyncpa [#allocation12], 1
    %745 = vsyncpa [#allocation15], 1
    %746 = vsyncpa [#allocation18], 1
    %747 = vsyncpa [#allocation21], 1
    %748 = vsyncpa [#allocation4], 1

// kernel: tpu_custom_call.1
$region0: #{tpu_custom_call.1}
  #allocation0 [shape = 'u32[]', space=smem, size = 0x4, offset = 0x4, fixed_abs, tag = 'smem constant byte address 0x4 - core index']
  #allocation1 [shape = 'u32[144,128]{1,0:T(1,128)}', space=vmem, size = 0x12000, scoped, tag = 'internal scratch']
  %s0 = inlined_call_operand.hbm [shape: bf16[16,128], index: 0, kind: input, shape index: {}]
  %s1 = inlined_call_operand.hbm [shape: bf16[16,8], index: 1, kind: input, shape index: {}]
  %s2 = inlined_call_operand.hbm [shape: bf16[8,128], index: 2, kind: input, shape index: {}]
  %s3 = inlined_call_operand.hbm [shape: f32[1,128], index: 3, kind: input, shape index: {}]
  %s4 = inlined_call_operand.hbm [shape: bf16[128,128], index: 4, kind: input, shape index: {}]
  %s5 = inlined_call_operand.hbm [shape: f32[1,128], index: 5, kind: input, shape index: {}]
  %s6 = inlined_call_operand.hbm [shape: bf16[128,128], index: 6, kind: input, shape index: {}]
  %s7 = inlined_call_operand.hbm [shape: f32[1,128], index: 7, kind: input, shape index: {}]
  %s8 = inlined_call_operand.hbm [shape: bf16[128,128], index: 8, kind: input, shape index: {}]
  %s9 = inlined_call_operand.hbm [shape: f32[1,128], index: 9, kind: input, shape index: {}]
  %s10 = inlined_call_operand.hbm [shape: bf16[128,128], index: 10, kind: input, shape index: {}]
  %s11 = inlined_call_operand.hbm [shape: f32[1,128], index: 11, kind: input, shape index: {}]
  %s12 = inlined_call_operand.hbm [shape: f32[16,128], index: 12, kind: output, shape index: {}]
  %s13 = sld [smem:[#allocation0]]
  $region106: #{tpu_custom_call.1} parent=0
    _
  %s15 = ssub.s32 1, %s13
  %s16 = scalar_select 0, %s15, %s13
  $region1: #{tpu_custom_call.1} parent=0
    #allocation2 [shape = 'u8[4096]{0}', space=vmem, size = 0x1000, scoped, tag = 'input window, operand 0, single buffered']
    #allocation3 [shape = 's32[1]{0}', space=sflag, size = 0x4, scoped, tag = 'scoped memory for tpu_custom_call.1']
    #allocation4 [shape = 's32[1]{0}', space=sflag, size = 0x4, scoped, tag = 'scoped memory for tpu_custom_call.1']
    #allocation5 [shape = 'u8[4096]{0}', space=vmem, size = 0x1000, scoped, tag = 'input window, operand 1, single buffered']
    #allocation6 [shape = 's32[1]{0}', space=sflag, size = 0x4, scoped, tag = 'scoped memory for tpu_custom_call.1']
    #allocation7 [shape = 'u8[2048]{0}', space=vmem, size = 0x800, scoped, tag = 'input window, operand 2, single buffered']
    #allocation8 [shape = 'u8[512]{0}', space=vmem, size = 0x400, scoped, tag = 'input window, operand 3, single buffered']
    #allocation9 [shape = 's32[1]{0}', space=sflag, size = 0x4, scoped, tag = 'scoped memory for tpu_custom_call.1']
    #allocation10 [shape = 'u8[32768]{0}', space=vmem, size = 0x8000, scoped, tag = 'input window, operand 4, single buffered']
    #allocation11 [shape = 'u8[512]{0}', space=vmem, size = 0x400, scoped, tag = 'input window, operand 5, single buffered']
    #allocation12 [shape = 's32[1]{0}', space=sflag, size = 0x4, scoped, tag = 'scoped memory for tpu_custom_call.1']
    #allocation13 [shape = 'u8[32768]{0}', space=vmem, size = 0x8000, scoped, tag = 'input window, operand 6, single buffered']
    #allocation14 [shape = 'u8[512]{0}', space=vmem, size = 0x400, scoped, tag = 'input window, operand 7, single buffered']
    #allocation15 [shape = 's32[1]{0}', space=sflag, size = 0x4, scoped, tag = 'scoped memory for tpu_custom_call.1']
    #allocation16 [shape = 'u8[32768]{0}', space=vmem, size = 0x8000, scoped, tag = 'input window, operand 8, single buffered']
    #allocation17 [shape = 'u8[512]{0}', space=vmem, size = 0x400, scoped, tag = 'input window, operand 9, single buffered']
    #allocation18 [shape = 's32[1]{0}', space=sflag, size = 0x4, scoped, tag = 'scoped memory for tpu_custom_call.1']
    #allocation19 [shape = 'u8[32768]{0}', space=vmem, size = 0x8000, scoped, tag = 'input window, operand 10, single buffered']
    #allocation20 [shape = 'u8[512]{0}', space=vmem, size = 0x400, scoped, tag = 'input window, operand 11, single buffered']
    #allocation21 [shape = 's32[1]{0}', space=sflag, size = 0x4, scoped, tag = 'scoped memory for tpu_custom_call.1']
    #allocation22 [shape = 'u8[8192]{0}', space=vmem, size = 0x2000, scoped, tag = 'output window, operand 0, single buffered']
    %17 = vsyncpa [#allocation3], 0
    %18 = vsyncpa [#allocation6], 0
    %19 = vsyncpa [#allocation9], 0
    %20 = vsyncpa [#allocation12], 0
    %21 = vsyncpa [#allocation15], 0
    %22 = vsyncpa [#allocation18], 0
    %23 = vsyncpa [#allocation21], 0
    %24 = vsyncpa [#allocation4], 0
    // Predicated region
    $region2: #{tpu_custom_call.1} parent=1 // pred_check
      _
    $region3: #{tpu_custom_call.1} parent=1 // pred_check_branch
      %26 = sbr.rel (0) target = $region5
    $region4: #{tpu_custom_call.1} parent=1 // pred_region
      %s28 = ssub.s32 128, 128
      %29 = vsyncadd [#allocation3], %s28
      %s30 = sshll.u32 [#allocation2], 4
      %s31 = int_to_ptr.vmem [resolvable:$true] %s30
      %36 = dma.hbm_to_vmem [thread:$0]  %s0, 128, %s31, [#allocation3], 64, 64, 4
    $region5: #{tpu_custom_call.1} parent=1 // pred_fallthru
      _
    // Predicated region
    $region6: #{tpu_custom_call.1} parent=1 // pred_check
      _
    $region7: #{tpu_custom_call.1} parent=1 // pred_check_branch
      %38 = sbr.rel (0) target = $region9
    $region8: #{tpu_custom_call.1} parent=1 // pred_region
      %s40 = ssub.s32 128, 128
      %41 = vsyncadd [#allocation6], %s40
      %s42 = sshll.u32 [#allocation5], 4
      %s43 = int_to_ptr.vmem [resolvable:$true] %s42
      %48 = dma.hbm_to_vmem [thread:$0]  %s1, 128, %s43, [#allocation6], 64, 64, 4
    $region9: #{tpu_custom_call.1} parent=1 // pred_fallthru
      _
    // Predicated region
    $region10: #{tpu_custom_call.1} parent=1 // pred_check
      _
    $region11: #{tpu_custom_call.1} parent=1 // pred_check_branch
      %50 = sbr.rel (0) target = $region13
    $region12: #{tpu_custom_call.1} parent=1 // pred_region
      %s52 = ssub.s32 64, 64
      %53 = vsyncadd [#allocation6], %s52
      %s55 = sshll.u32 [#allocation7], 4
      %s56 = int_to_ptr.vmem [resolvable:$true] %s55
      %58 = dma.hbm_to_vmem [thread:$0]  %s2, 64, %s56, [#allocation6]
    $region13: #{tpu_custom_call.1} parent=1 // pred_fallthru
      _
    // Predicated region
    $region14: #{tpu_custom_call.1} parent=1 // pred_check
      _
    $region15: #{tpu_custom_call.1} parent=1 // pred_check_branch
      %60 = sbr.rel (0) target = $region17
    $region16: #{tpu_custom_call.1} parent=1 // pred_region
      %s62 = ssub.s32 16, 16
      %63 = vsyncadd [#allocation9], %s62
      %s65 = sshll.u32 [#allocation8], 4
      %s66 = int_to_ptr.vmem [resolvable:$true] %s65
      %68 = dma.hbm_to_vmem [thread:$0]  %s3, 16, %s66, [#allocation9]
    $region17: #{tpu_custom_call.1} parent=1 // pred_fallthru
      _
    // Predicated region
    $region18: #{tpu_custom_call.1} parent=1 // pred_check
      _
    $region19: #{tpu_custom_call.1} parent=1 // pred_check_branch
      %70 = sbr.rel (0) target = $region21
    $region20: #{tpu_custom_call.1} parent=1 // pred_region
      %s72 = ssub.s32 1024, 1024
      %73 = vsyncadd [#allocation9], %s72
      %s74 = sshll.u32 [#allocation10], 4
      %s75 = int_to_ptr.vmem [resolvable:$true] %s74
      %80 = dma.hbm_to_vmem [thread:$0]  %s4, 1024, %s75, [#allocation9], 64, 64, 4
    $region21: #{tpu_custom_call.1} parent=1 // pred_fallthru
      _
    // Predicated region
    $region22: #{tpu_custom_call.1} parent=1 // pred_check
      _
    $region23: #{tpu_custom_call.1} parent=1 // pred_check_branch
      %82 = sbr.rel (0) target = $region25
    $region24: #{tpu_custom_call.1} parent=1 // pred_region
      %s84 = ssub.s32 16, 16
      %85 = vsyncadd [#allocation12], %s84
      %s87 = sshll.u32 [#allocation11], 4
      %s88 = int_to_ptr.vmem [resolvable:$true] %s87
      %90 = dma.hbm_to_vmem [thread:$0]  %s5, 16, %s88, [#allocation12]
    $region25: #{tpu_custom_call.1} parent=1 // pred_fallthru
      _
    // Predicated region
    $region26: #{tpu_custom_call.1} parent=1 // pred_check
      _
    $region27: #{tpu_custom_call.1} parent=1 // pred_check_branch
      %92 = sbr.rel (0) target = $region29
    $region28: #{tpu_custom_call.1} parent=1 // pred_region
      %s94 = ssub.s32 1024, 1024
      %95 = vsyncadd [#allocation12], %s94
      %s96 = sshll.u32 [#allocation13], 4
      %s97 = int_to_ptr.vmem [resolvable:$true] %s96
      %102 = dma.hbm_to_vmem [thread:$0]  %s6, 1024, %s97, [#allocation12], 64, 64, 4
    $region29: #{tpu_custom_call.1} parent=1 // pred_fallthru
      _
    // Predicated region
    $region30: #{tpu_custom_call.1} parent=1 // pred_check
      _
    $region31: #{tpu_custom_call.1} parent=1 // pred_check_branch
      %104 = sbr.rel (0) target = $region33
    $region32: #{tpu_custom_call.1} parent=1 // pred_region
      %s106 = ssub.s32 16, 16
      %107 = vsyncadd [#allocation15], %s106
      %s109 = sshll.u32 [#allocation14], 4
      %s110 = int_to_ptr.vmem [resolvable:$true] %s109
      %112 = dma.hbm_to_vmem [thread:$0]  %s7, 16, %s110, [#allocation15]
    $region33: #{tpu_custom_call.1} parent=1 // pred_fallthru
      _
    // Predicated region
    $region34: #{tpu_custom_call.1} parent=1 // pred_check
      _
    $region35: #{tpu_custom_call.1} parent=1 // pred_check_branch
      %114 = sbr.rel (0) target = $region37
    $region36: #{tpu_custom_call.1} parent=1 // pred_region
      %s116 = ssub.s32 1024, 1024
      %117 = vsyncadd [#allocation15], %s116
      %s118 = sshll.u32 [#allocation16], 4
      %s119 = int_to_ptr.vmem [resolvable:$true] %s118
      %124 = dma.hbm_to_vmem [thread:$0]  %s8, 1024, %s119, [#allocation15], 64, 64, 4
    $region37: #{tpu_custom_call.1} parent=1 // pred_fallthru
      _
    // Predicated region
    $region38: #{tpu_custom_call.1} parent=1 // pred_check
      _
    $region39: #{tpu_custom_call.1} parent=1 // pred_check_branch
      %126 = sbr.rel (0) target = $region41
    $region40: #{tpu_custom_call.1} parent=1 // pred_region
      %s128 = ssub.s32 16, 16
      %129 = vsyncadd [#allocation18], %s128
      %s131 = sshll.u32 [#allocation17], 4
      %s132 = int_to_ptr.vmem [resolvable:$true] %s131
      %134 = dma.hbm_to_vmem [thread:$0]  %s9, 16, %s132, [#allocation18]
    $region41: #{tpu_custom_call.1} parent=1 // pred_fallthru
      _
    // Predicated region
    $region42: #{tpu_custom_call.1} parent=1 // pred_check
      _
    $region43: #{tpu_custom_call.1} parent=1 // pred_check_branch
      %136 = sbr.rel (0) target = $region45
    $region44: #{tpu_custom_call.1} parent=1 // pred_region
      %s138 = ssub.s32 1024, 1024
      %139 = vsyncadd [#allocation18], %s138
      %s140 = sshll.u32 [#allocation19], 4
      %s141 = int_to_ptr.vmem [resolvable:$true] %s140
      %146 = dma.hbm_to_vmem [thread:$0]  %s10, 1024, %s141, [#allocation18], 64, 64, 4
    $region45: #{tpu_custom_call.1} parent=1 // pred_fallthru
      _
    // Predicated region
    $region46: #{tpu_custom_call.1} parent=1 // pred_check
      _
    $region47: #{tpu_custom_call.1} parent=1 // pred_check_branch
      %148 = sbr.rel (0) target = $region49
    $region48: #{tpu_custom_call.1} parent=1 // pred_region
      %s150 = ssub.s32 16, 16
      %151 = vsyncadd [#allocation21], %s150
      %s153 = sshll.u32 [#allocation20], 4
      %s154 = int_to_ptr.vmem [resolvable:$true] %s153
      %156 = dma.hbm_to_vmem [thread:$0]  %s11, 16, %s154, [#allocation21]
    $region49: #{tpu_custom_call.1} parent=1 // pred_fallthru
      _
    // Predicated region
    $region50: #{tpu_custom_call.1} parent=1 // pred_check
      _
    $region51: #{tpu_custom_call.1} parent=1 // pred_check_branch
      %158 = sbr.rel (0) target = $region53
    $region52: #{tpu_custom_call.1} parent=1 // pred_region
      %159 = dma.done [#allocation3], 128
    $region53: #{tpu_custom_call.1} parent=1 // pred_fallthru
      _
    // Predicated region
    $region54: #{tpu_custom_call.1} parent=1 // pred_check
      _
    $region55: #{tpu_custom_call.1} parent=1 // pred_check_branch
      %161 = sbr.rel (0) target = $region57
    $region56: #{tpu_custom_call.1} parent=1 // pred_region
      %162 = dma.done [#allocation6], 128
    $region57: #{tpu_custom_call.1} parent=1 // pred_fallthru
      _
    // Predicated region
    $region58: #{tpu_custom_call.1} parent=1 // pred_check
      _
    $region59: #{tpu_custom_call.1} parent=1 // pred_check_branch
      %164 = sbr.rel (0) target = $region61
    $region60: #{tpu_custom_call.1} parent=1 // pred_region
      %165 = dma.done [#allocation6], 64
    $region61: #{tpu_custom_call.1} parent=1 // pred_fallthru
      _
    // Predicated region
    $region62: #{tpu_custom_call.1} parent=1 // pred_check
      _
    $region63: #{tpu_custom_call.1} parent=1 // pred_check_branch
      %167 = sbr.rel (0) target = $region65
    $region64: #{tpu_custom_call.1} parent=1 // pred_region
      %168 = dma.done [#allocation9], 16
    $region65: #{tpu_custom_call.1} parent=1 // pred_fallthru
      _
    // Predicated region
    $region66: #{tpu_custom_call.1} parent=1 // pred_check
      _
    $region67: #{tpu_custom_call.1} parent=1 // pred_check_branch
      %170 = sbr.rel (0) target = $region69
    $region68: #{tpu_custom_call.1} parent=1 // pred_region
      %171 = dma.done [#allocation9], 1024
    $region69: #{tpu_custom_call.1} parent=1 // pred_fallthru
      _
    // Predicated region
    $region70: #{tpu_custom_call.1} parent=1 // pred_check
      _
    $region71: #{tpu_custom_call.1} parent=1 // pred_check_branch
      %173 = sbr.rel (0) target = $region73
    $region72: #{tpu_custom_call.1} parent=1 // pred_region
      %174 = dma.done [#allocation12], 16
    $region73: #{tpu_custom_call.1} parent=1 // pred_fallthru
      _
    // Predicated region
    $region74: #{tpu_custom_call.1} parent=1 // pred_check
      _
    $region75: #{tpu_custom_call.1} parent=1 // pred_check_branch
      %176 = sbr.rel (0) target = $region77
    $region76: #{tpu_custom_call.1} parent=1 // pred_region
      %177 = dma.done [#allocation12], 1024
    $region77: #{tpu_custom_call.1} parent=1 // pred_fallthru
      _
    // Predicated region
    $region78: #{tpu_custom_call.1} parent=1 // pred_check
      _
    $region79: #{tpu_custom_call.1} parent=1 // pred_check_branch
      %179 = sbr.rel (0) target = $region81
    $region80: #{tpu_custom_call.1} parent=1 // pred_region
      %180 = dma.done [#allocation15], 16
    $region81: #{tpu_custom_call.1} parent=1 // pred_fallthru
      _
    // Predicated region
    $region82: #{tpu_custom_call.1} parent=1 // pred_check
      _
    $region83: #{tpu_custom_call.1} parent=1 // pred_check_branch
      %182 = sbr.rel (0) target = $region85
    $region84: #{tpu_custom_call.1} parent=1 // pred_region
      %183 = dma.done [#allocation15], 1024
    $region85: #{tpu_custom_call.1} parent=1 // pred_fallthru
      _
    // Predicated region
    $region86: #{tpu_custom_call.1} parent=1 // pred_check
      _
    $region87: #{tpu_custom_call.1} parent=1 // pred_check_branch
      %185 = sbr.rel (0) target = $region89
    $region88: #{tpu_custom_call.1} parent=1 // pred_region
      %186 = dma.done [#allocation18], 16
    $region89: #{tpu_custom_call.1} parent=1 // pred_fallthru
      _
    // Predicated region
    $region90: #{tpu_custom_call.1} parent=1 // pred_check
      _
    $region91: #{tpu_custom_call.1} parent=1 // pred_check_branch
      %188 = sbr.rel (0) target = $region93
    $region92: #{tpu_custom_call.1} parent=1 // pred_region
      %189 = dma.done [#allocation18], 1024
    $region93: #{tpu_custom_call.1} parent=1 // pred_fallthru
      _
    // Predicated region
    $region94: #{tpu_custom_call.1} parent=1 // pred_check
      _
    $region95: #{tpu_custom_call.1} parent=1 // pred_check_branch
      %191 = sbr.rel (0) target = $region97
    $region96: #{tpu_custom_call.1} parent=1 // pred_region
      %192 = dma.done [#allocation21], 16
    $region97: #{tpu_custom_call.1} parent=1 // pred_fallthru
      _
    %v194 = vld [vmem:[#allocation5] sm:$0xf]
    %v195 = vld [vmem:[#allocation5 + $0x4] sm:$0xf]
    %v196 = vld [vmem:[#allocation7] sm:$0xf]
    %v197 = vld [vmem:[#allocation8] sm:$0x1]
    %v199 = vlaneseq
    %v200 = vshrl.u32 %v199, 7
    %v201 = vsub.s32 0, %v200
    %v202 = vrot.slane %v197, %v201
    %v206 = vunpack.c.l.b16 %v194
    %v207 = vunpack.c.l.b16 %v195
    %v208 = vpack.c.b16 %v207, %v206
    %vm209 = vcmask 64512
    %v211 = vsel %vm209, %v208, 0
    %vm213 = vcmask 1043456
    %v215 = vsel %vm213, %v196, 0
    %217 = vmatprep.subr.bf16.mxu0 0
    %218 = vmatpush1.bf16.msra.mxu0 %v215
    %219 = vmatprep.subr.bf16.mxu0 0
    %220 = vmatpush1.bf16.msra.mxu0 0
    %221 = vmatprep.subr.bf16.mxu0 0
    %222 = vmatpush1.bf16.msra.mxu0 0
    %223 = vmatprep.subr.bf16.mxu0 0
    %224 = vmatpush1.bf16.msra.mxu0 0
    %225 = vmatprep.subr.bf16.mxu0 0
    %226 = vmatpush1.bf16.msra.mxu0 0
    %227 = vmatprep.subr.bf16.mxu0 0
    %228 = vmatpush1.bf16.msra.mxu0 0
    %229 = vmatprep.subr.bf16.mxu0 0
    %230 = vmatpush1.bf16.msra.mxu0 0
    %231 = vmatprep.subr.bf16.mxu0 0
    %232 = vmatpush1.bf16.msra.mxu0 0
    %233 = vmatprep.subr.bf16.mxu0 0
    %234 = vmatpush1.bf16.msra.mxu0 0
    %235 = vmatprep.subr.bf16.mxu0 0
    %236 = vmatpush1.bf16.msra.mxu0 0
    %237 = vmatprep.subr.bf16.mxu0 0
    %238 = vmatpush1.bf16.msra.mxu0 0
    %239 = vmatprep.subr.bf16.mxu0 0
    %240 = vmatpush1.bf16.msra.mxu0 0
    %241 = vmatprep.subr.bf16.mxu0 0
    %242 = vmatpush1.bf16.msra.mxu0 0
    %243 = vmatprep.subr.bf16.mxu0 0
    %244 = vmatpush1.bf16.msra.mxu0 0
    %245 = vmatprep.subr.bf16.mxu0 0
    %246 = vmatpush1.bf16.msra.mxu0 0
    %247 = vmatprep.subr.bf16.mxu0 0
    %248 = vmatpush1.bf16.msra.mxu0 0
    %249 = vmatprep.mubr.bf16.mxu0 0
    %250 = vmatmul.mubr.bf16.gmra.mrb[0].mxu0 %v211
    %v251 = vpop.f32.mrb[0].mxu0
    %v252 = vadd.f32 %v202, %v251
    %v253 = vpop.f32.mrb[0].mxu0
    %v254 = vpop.f32.mrb[0].mxu0
    %v255 = vadd.f32 %v202, %v254
    %v256 = vpop.f32.mrb[0].mxu0
    %257 = vdwg.mxu0
    %v258 = vtanh.pop %v252
    %v259 = vtanh.pop %v255
    %v260 = vpack.c.bf16 %v259, %v258
    %v261 = vld [vmem:[#allocation10] sm:$0xf]
    %v262 = vld [vmem:[#allocation10 + $0x4] sm:$0xf]
    %v263 = vld [vmem:[#allocation10 + $0x8] sm:$0xf]
    %v264 = vld [vmem:[#allocation10 + $0xc] sm:$0xf]
    %v265 = vld [vmem:[#allocation10 + $0x10] sm:$0xf]
    %v266 = vld [vmem:[#allocation10 + $0x14] sm:$0xf]
    %v267 = vld [vmem:[#allocation10 + $0x18] sm:$0xf]
    %v268 = vld [vmem:[#allocation10 + $0x1c] sm:$0xf]
    %v269 = vld [vmem:[#allocation10 + $0x20] sm:$0xf]
    %v270 = vld [vmem:[#allocation10 + $0x24] sm:$0xf]
    %v271 = vld [vmem:[#allocation10 + $0x28] sm:$0xf]
    %v272 = vld [vmem:[#allocation10 + $0x2c] sm:$0xf]
    %v273 = vld [vmem:[#allocation10 + $0x30] sm:$0xf]
    %v274 = vld [vmem:[#allocation10 + $0x34] sm:$0xf]
    %v275 = vld [vmem:[#allocation10 + $0x38] sm:$0xf]
    %v276 = vld [vmem:[#allocation10 + $0x3c] sm:$0xf]
    %v277 = vld [vmem:[#allocation11] sm:$0x1]
    %v279 = vlaneseq
    %v280 = vshrl.u32 %v279, 7
    %v281 = vsub.s32 0, %v280
    %v282 = vrot.slane %v277, %v281
    %v300 = vunpack.c.l.b16 %v261
    %v301 = vunpack.c.l.b16 %v262
    %v302 = vunpack.c.l.b16 %v263
    %v303 = vunpack.c.l.b16 %v264
    %v304 = vunpack.c.l.b16 %v265
    %v305 = vunpack.c.l.b16 %v266
    %v306 = vunpack.c.l.b16 %v267
    %v307 = vunpack.c.l.b16 %v268
    %v308 = vunpack.c.l.b16 %v269
    %v309 = vunpack.c.l.b16 %v270
    %v310 = vunpack.c.l.b16 %v271
    %v311 = vunpack.c.l.b16 %v272
    %v312 = vunpack.c.l.b16 %v273
    %v313 = vunpack.c.l.b16 %v274
    %v314 = vunpack.c.l.b16 %v275
    %v315 = vunpack.c.l.b16 %v276
    %v316 = vpack.c.b16 %v301, %v300
    %v317 = vpack.c.b16 %v303, %v302
    %v318 = vpack.c.b16 %v305, %v304
    %v319 = vpack.c.b16 %v307, %v306
    %v320 = vpack.c.b16 %v309, %v308
    %v321 = vpack.c.b16 %v311, %v310
    %v322 = vpack.c.b16 %v313, %v312
    %v323 = vpack.c.b16 %v315, %v314
    %332 = vmatprep.subr.bf16.mxu0 0
    %333 = vmatpush1.bf16.msra.mxu0 %v316
    %334 = vmatprep.subr.bf16.mxu0 0
    %335 = vmatpush1.bf16.msra.mxu0 %v317
    %336 = vmatprep.subr.bf16.mxu0 0
    %337 = vmatpush1.bf16.msra.mxu0 %v318
    %338 = vmatprep.subr.bf16.mxu0 0
    %339 = vmatpush1.bf16.msra.mxu0 %v319
    %340 = vmatprep.subr.bf16.mxu0 0
    %341 = vmatpush1.bf16.msra.mxu0 %v320
    %342 = vmatprep.subr.bf16.mxu0 0
    %343 = vmatpush1.bf16.msra.mxu0 %v321
    %344 = vmatprep.subr.bf16.mxu0 0
    %345 = vmatpush1.bf16.msra.mxu0 %v322
    %346 = vmatprep.subr.bf16.mxu0 0
    %347 = vmatpush1.bf16.msra.mxu0 %v323
    %348 = vmatprep.subr.bf16.mxu0 0
    %349 = vmatpush1.bf16.msra.mxu0 0
    %350 = vmatprep.subr.bf16.mxu0 0
    %351 = vmatpush1.bf16.msra.mxu0 0
    %352 = vmatprep.subr.bf16.mxu0 0
    %353 = vmatpush1.bf16.msra.mxu0 0
    %354 = vmatprep.subr.bf16.mxu0 0
    %355 = vmatpush1.bf16.msra.mxu0 0
    %356 = vmatprep.subr.bf16.mxu0 0
    %357 = vmatpush1.bf16.msra.mxu0 0
    %358 = vmatprep.subr.bf16.mxu0 0
    %359 = vmatpush1.bf16.msra.mxu0 0
    %360 = vmatprep.subr.bf16.mxu0 0
    %361 = vmatpush1.bf16.msra.mxu0 0
    %362 = vmatprep.subr.bf16.mxu0 0
    %363 = vmatpush1.bf16.msra.mxu0 0
    %364 = vmatprep.mubr.bf16.mxu0 0
    %365 = vmatmul.mubr.bf16.gmra.mrb[0].mxu0 %v260
    %v366 = vpop.f32.mrb[0].mxu0
    %v367 = vadd.f32 %v282, %v366
    %v368 = vpop.f32.mrb[0].mxu0
    %v369 = vpop.f32.mrb[0].mxu0
    %v370 = vadd.f32 %v282, %v369
    %v371 = vpop.f32.mrb[0].mxu0
    %372 = vdwg.mxu0
    %v373 = vtanh.pop %v367
    %v374 = vtanh.pop %v370
    %v375 = vpack.c.bf16 %v374, %v373
    %v376 = vld [vmem:[#allocation13] sm:$0xf]
    %v377 = vld [vmem:[#allocation13 + $0x4] sm:$0xf]
    %v378 = vld [vmem:[#allocation13 + $0x8] sm:$0xf]
    %v379 = vld [vmem:[#allocation13 + $0xc] sm:$0xf]
    %v380 = vld [vmem:[#allocation13 + $0x10] sm:$0xf]
    %v381 = vld [vmem:[#allocation13 + $0x14] sm:$0xf]
    %v382 = vld [vmem:[#allocation13 + $0x18] sm:$0xf]
    %v383 = vld [vmem:[#allocation13 + $0x1c] sm:$0xf]
    %v384 = vld [vmem:[#allocation13 + $0x20] sm:$0xf]
    %v385 = vld [vmem:[#allocation13 + $0x24] sm:$0xf]
    %v386 = vld [vmem:[#allocation13 + $0x28] sm:$0xf]
    %v387 = vld [vmem:[#allocation13 + $0x2c] sm:$0xf]
    %v388 = vld [vmem:[#allocation13 + $0x30] sm:$0xf]
    %v389 = vld [vmem:[#allocation13 + $0x34] sm:$0xf]
    %v390 = vld [vmem:[#allocation13 + $0x38] sm:$0xf]
    %v391 = vld [vmem:[#allocation13 + $0x3c] sm:$0xf]
    %v392 = vld [vmem:[#allocation14] sm:$0x1]
    %v394 = vlaneseq
    %v395 = vshrl.u32 %v394, 7
    %v396 = vsub.s32 0, %v395
    %v397 = vrot.slane %v392, %v396
    %v415 = vunpack.c.l.b16 %v376
    %v416 = vunpack.c.l.b16 %v377
    %v417 = vunpack.c.l.b16 %v378
    %v418 = vunpack.c.l.b16 %v379
    %v419 = vunpack.c.l.b16 %v380
    %v420 = vunpack.c.l.b16 %v381
    %v421 = vunpack.c.l.b16 %v382
    %v422 = vunpack.c.l.b16 %v383
    %v423 = vunpack.c.l.b16 %v384
    %v424 = vunpack.c.l.b16 %v385
    %v425 = vunpack.c.l.b16 %v386
    %v426 = vunpack.c.l.b16 %v387
    %v427 = vunpack.c.l.b16 %v388
    %v428 = vunpack.c.l.b16 %v389
    %v429 = vunpack.c.l.b16 %v390
    %v430 = vunpack.c.l.b16 %v391
    %v431 = vpack.c.b16 %v416, %v415
    %v432 = vpack.c.b16 %v418, %v417
    %v433 = vpack.c.b16 %v420, %v419
    %v434 = vpack.c.b16 %v422, %v421
    %v435 = vpack.c.b16 %v424, %v423
    %v436 = vpack.c.b16 %v426, %v425
    %v437 = vpack.c.b16 %v428, %v427
    %v438 = vpack.c.b16 %v430, %v429
    %447 = vmatprep.subr.bf16.mxu0 0
    %448 = vmatpush1.bf16.msra.mxu0 %v431
    %449 = vmatprep.subr.bf16.mxu0 0
    %450 = vmatpush1.bf16.msra.mxu0 %v432
    %451 = vmatprep.subr.bf16.mxu0 0
    %452 = vmatpush1.bf16.msra.mxu0 %v433
    %453 = vmatprep.subr.bf16.mxu0 0
    %454 = vmatpush1.bf16.msra.mxu0 %v434
    %455 = vmatprep.subr.bf16.mxu0 0
    %456 = vmatpush1.bf16.msra.mxu0 %v435
    %457 = vmatprep.subr.bf16.mxu0 0
    %458 = vmatpush1.bf16.msra.mxu0 %v436
    %459 = vmatprep.subr.bf16.mxu0 0
    %460 = vmatpush1.bf16.msra.mxu0 %v437
    %461 = vmatprep.subr.bf16.mxu0 0
    %462 = vmatpush1.bf16.msra.mxu0 %v438
    %463 = vmatprep.subr.bf16.mxu0 0
    %464 = vmatpush1.bf16.msra.mxu0 0
    %465 = vmatprep.subr.bf16.mxu0 0
    %466 = vmatpush1.bf16.msra.mxu0 0
    %467 = vmatprep.subr.bf16.mxu0 0
    %468 = vmatpush1.bf16.msra.mxu0 0
    %469 = vmatprep.subr.bf16.mxu0 0
    %470 = vmatpush1.bf16.msra.mxu0 0
    %471 = vmatprep.subr.bf16.mxu0 0
    %472 = vmatpush1.bf16.msra.mxu0 0
    %473 = vmatprep.subr.bf16.mxu0 0
    %474 = vmatpush1.bf16.msra.mxu0 0
    %475 = vmatprep.subr.bf16.mxu0 0
    %476 = vmatpush1.bf16.msra.mxu0 0
    %477 = vmatprep.subr.bf16.mxu0 0
    %478 = vmatpush1.bf16.msra.mxu0 0
    %479 = vmatprep.mubr.bf16.mxu0 0
    %480 = vmatmul.mubr.bf16.gmra.mrb[0].mxu0 %v375
    %v481 = vpop.f32.mrb[0].mxu0
    %v482 = vadd.f32 %v397, %v481
    %v483 = vpop.f32.mrb[0].mxu0
    %v484 = vpop.f32.mrb[0].mxu0
    %v485 = vadd.f32 %v397, %v484
    %v486 = vpop.f32.mrb[0].mxu0
    %487 = vdwg.mxu0
    %v488 = vtanh.pop %v482
    %v489 = vtanh.pop %v485
    %v490 = vld [vmem:[#allocation2] sm:$0xf]
    %v491 = vld [vmem:[#allocation2 + $0x4] sm:$0xf]
    %v492 = vunpack.c.l.bf16 %v490
    %v493 = vunpack.c.l.bf16 %v491
    %v494 = vadd.f32 %v492, %v488
    %v495 = vadd.f32 %v493, %v489
    %v496 = vpack.c.bf16 %v495, %v494
    %v497 = vld [vmem:[#allocation16] sm:$0xf]
    %v498 = vld [vmem:[#allocation16 + $0x4] sm:$0xf]
    %v499 = vld [vmem:[#allocation16 + $0x8] sm:$0xf]
    %v500 = vld [vmem:[#allocation16 + $0xc] sm:$0xf]
    %v501 = vld [vmem:[#allocation16 + $0x10] sm:$0xf]
    %v502 = vld [vmem:[#allocation16 + $0x14] sm:$0xf]
    %v503 = vld [vmem:[#allocation16 + $0x18] sm:$0xf]
    %v504 = vld [vmem:[#allocation16 + $0x1c] sm:$0xf]
    %v505 = vld [vmem:[#allocation16 + $0x20] sm:$0xf]
    %v506 = vld [vmem:[#allocation16 + $0x24] sm:$0xf]
    %v507 = vld [vmem:[#allocation16 + $0x28] sm:$0xf]
    %v508 = vld [vmem:[#allocation16 + $0x2c] sm:$0xf]
    %v509 = vld [vmem:[#allocation16 + $0x30] sm:$0xf]
    %v510 = vld [vmem:[#allocation16 + $0x34] sm:$0xf]
    %v511 = vld [vmem:[#allocation16 + $0x38] sm:$0xf]
    %v512 = vld [vmem:[#allocation16 + $0x3c] sm:$0xf]
    %v513 = vld [vmem:[#allocation17] sm:$0x1]
    %v515 = vlaneseq
    %v516 = vshrl.u32 %v515, 7
    %v517 = vsub.s32 0, %v516
    %v518 = vrot.slane %v513, %v517
    %v536 = vunpack.c.l.b16 %v497
    %v537 = vunpack.c.l.b16 %v498
    %v538 = vunpack.c.l.b16 %v499
    %v539 = vunpack.c.l.b16 %v500
    %v540 = vunpack.c.l.b16 %v501
    %v541 = vunpack.c.l.b16 %v502
    %v542 = vunpack.c.l.b16 %v503
    %v543 = vunpack.c.l.b16 %v504
    %v544 = vunpack.c.l.b16 %v505
    %v545 = vunpack.c.l.b16 %v506
    %v546 = vunpack.c.l.b16 %v507
    %v547 = vunpack.c.l.b16 %v508
    %v548 = vunpack.c.l.b16 %v509
    %v549 = vunpack.c.l.b16 %v510
    %v550 = vunpack.c.l.b16 %v511
    %v551 = vunpack.c.l.b16 %v512
    %v552 = vpack.c.b16 %v537, %v536
    %v553 = vpack.c.b16 %v539, %v538
    %v554 = vpack.c.b16 %v541, %v540
    %v555 = vpack.c.b16 %v543, %v542
    %v556 = vpack.c.b16 %v545, %v544
    %v557 = vpack.c.b16 %v547, %v546
    %v558 = vpack.c.b16 %v549, %v548
    %v559 = vpack.c.b16 %v551, %v550
    %568 = vmatprep.subr.bf16.mxu0 0
    %569 = vmatpush1.bf16.msra.mxu0 %v552
    %570 = vmatprep.subr.bf16.mxu0 0
    %571 = vmatpush1.bf16.msra.mxu0 %v553
    %572 = vmatprep.subr.bf16.mxu0 0
    %573 = vmatpush1.bf16.msra.mxu0 %v554
    %574 = vmatprep.subr.bf16.mxu0 0
    %575 = vmatpush1.bf16.msra.mxu0 %v555
    %576 = vmatprep.subr.bf16.mxu0 0
    %577 = vmatpush1.bf16.msra.mxu0 %v556
    %578 = vmatprep.subr.bf16.mxu0 0
    %579 = vmatpush1.bf16.msra.mxu0 %v557
    %580 = vmatprep.subr.bf16.mxu0 0
    %581 = vmatpush1.bf16.msra.mxu0 %v558
    %582 = vmatprep.subr.bf16.mxu0 0
    %583 = vmatpush1.bf16.msra.mxu0 %v559
    %584 = vmatprep.subr.bf16.mxu0 0
    %585 = vmatpush1.bf16.msra.mxu0 0
    %586 = vmatprep.subr.bf16.mxu0 0
    %587 = vmatpush1.bf16.msra.mxu0 0
    %588 = vmatprep.subr.bf16.mxu0 0
    %589 = vmatpush1.bf16.msra.mxu0 0
    %590 = vmatprep.subr.bf16.mxu0 0
    %591 = vmatpush1.bf16.msra.mxu0 0
    %592 = vmatprep.subr.bf16.mxu0 0
    %593 = vmatpush1.bf16.msra.mxu0 0
    %594 = vmatprep.subr.bf16.mxu0 0
    %595 = vmatpush1.bf16.msra.mxu0 0
    %596 = vmatprep.subr.bf16.mxu0 0
    %597 = vmatpush1.bf16.msra.mxu0 0
    %598 = vmatprep.subr.bf16.mxu0 0
    %599 = vmatpush1.bf16.msra.mxu0 0
    %600 = vmatprep.mubr.bf16.mxu0 0
    %601 = vmatmul.mubr.bf16.gmra.mrb[0].mxu0 %v496
    %v602 = vpop.f32.mrb[0].mxu0
    %v603 = vadd.f32 %v518, %v602
    %v604 = vpop.f32.mrb[0].mxu0
    %v605 = vpop.f32.mrb[0].mxu0
    %v606 = vadd.f32 %v518, %v605
    %v607 = vpop.f32.mrb[0].mxu0
    %608 = vdwg.mxu0
    %v609 = vmax.f32 %v603, 0.0
    %v610 = vmax.f32 %v606, 0.0
    %v611 = vpack.c.bf16 %v610, %v609
    %v612 = vld [vmem:[#allocation19] sm:$0xf]
    %v613 = vld [vmem:[#allocation19 + $0x4] sm:$0xf]
    %v614 = vld [vmem:[#allocation19 + $0x8] sm:$0xf]
    %v615 = vld [vmem:[#allocation19 + $0xc] sm:$0xf]
    %v616 = vld [vmem:[#allocation19 + $0x10] sm:$0xf]
    %v617 = vld [vmem:[#allocation19 + $0x14] sm:$0xf]
    %v618 = vld [vmem:[#allocation19 + $0x18] sm:$0xf]
    %v619 = vld [vmem:[#allocation19 + $0x1c] sm:$0xf]
    %v620 = vld [vmem:[#allocation19 + $0x20] sm:$0xf]
    %v621 = vld [vmem:[#allocation19 + $0x24] sm:$0xf]
    %v622 = vld [vmem:[#allocation19 + $0x28] sm:$0xf]
    %v623 = vld [vmem:[#allocation19 + $0x2c] sm:$0xf]
    %v624 = vld [vmem:[#allocation19 + $0x30] sm:$0xf]
    %v625 = vld [vmem:[#allocation19 + $0x34] sm:$0xf]
    %v626 = vld [vmem:[#allocation19 + $0x38] sm:$0xf]
    %v627 = vld [vmem:[#allocation19 + $0x3c] sm:$0xf]
    %v628 = vld [vmem:[#allocation20] sm:$0x1]
    %v630 = vlaneseq
    %v631 = vshrl.u32 %v630, 7
    %v632 = vsub.s32 0, %v631
    %v633 = vrot.slane %v628, %v632
    %v651 = vunpack.c.l.b16 %v612
    %v652 = vunpack.c.l.b16 %v613
    %v653 = vunpack.c.l.b16 %v614
    %v654 = vunpack.c.l.b16 %v615
    %v655 = vunpack.c.l.b16 %v616
    %v656 = vunpack.c.l.b16 %v617
    %v657 = vunpack.c.l.b16 %v618
    %v658 = vunpack.c.l.b16 %v619
    %v659 = vunpack.c.l.b16 %v620
    %v660 = vunpack.c.l.b16 %v621
    %v661 = vunpack.c.l.b16 %v622
    %v662 = vunpack.c.l.b16 %v623
    %v663 = vunpack.c.l.b16 %v624
    %v664 = vunpack.c.l.b16 %v625
    %v665 = vunpack.c.l.b16 %v626
    %v666 = vunpack.c.l.b16 %v627
    %v667 = vpack.c.b16 %v652, %v651
    %v668 = vpack.c.b16 %v654, %v653
    %v669 = vpack.c.b16 %v656, %v655
    %v670 = vpack.c.b16 %v658, %v657
    %v671 = vpack.c.b16 %v660, %v659
    %v672 = vpack.c.b16 %v662, %v661
    %v673 = vpack.c.b16 %v664, %v663
    %v674 = vpack.c.b16 %v666, %v665
    %683 = vmatprep.subr.bf16.mxu0 0
    %684 = vmatpush1.bf16.msra.mxu0 %v667
    %685 = vmatprep.subr.bf16.mxu0 0
    %686 = vmatpush1.bf16.msra.mxu0 %v668
    %687 = vmatprep.subr.bf16.mxu0 0
    %688 = vmatpush1.bf16.msra.mxu0 %v669
    %689 = vmatprep.subr.bf16.mxu0 0
    %690 = vmatpush1.bf16.msra.mxu0 %v670
    %691 = vmatprep.subr.bf16.mxu0 0
    %692 = vmatpush1.bf16.msra.mxu0 %v671
    %693 = vmatprep.subr.bf16.mxu0 0
    %694 = vmatpush1.bf16.msra.mxu0 %v672
    %695 = vmatprep.subr.bf16.mxu0 0
    %696 = vmatpush1.bf16.msra.mxu0 %v673
    %697 = vmatprep.subr.bf16.mxu0 0
    %698 = vmatpush1.bf16.msra.mxu0 %v674
    %699 = vmatprep.subr.bf16.mxu0 0
    %700 = vmatpush1.bf16.msra.mxu0 0
    %701 = vmatprep.subr.bf16.mxu0 0
    %702 = vmatpush1.bf16.msra.mxu0 0
    %703 = vmatprep.subr.bf16.mxu0 0
    %704 = vmatpush1.bf16.msra.mxu0 0
    %705 = vmatprep.subr.bf16.mxu0 0
    %706 = vmatpush1.bf16.msra.mxu0 0
    %707 = vmatprep.subr.bf16.mxu0 0
    %708 = vmatpush1.bf16.msra.mxu0 0
    %709 = vmatprep.subr.bf16.mxu0 0
    %710 = vmatpush1.bf16.msra.mxu0 0
    %711 = vmatprep.subr.bf16.mxu0 0
    %712 = vmatpush1.bf16.msra.mxu0 0
    %713 = vmatprep.subr.bf16.mxu0 0
    %714 = vmatpush1.bf16.msra.mxu0 0
    %715 = vmatprep.mubr.bf16.mxu0 0
    %716 = vmatmul.mubr.bf16.gmra.mrb[0].mxu0 %v611
    %v717 = vpop.f32.mrb[0].mxu0
    %v718 = vadd.f32 %v633, %v717
    %v719 = vpop.f32.mrb[0].mxu0
    %v720 = vpop.f32.mrb[0].mxu0
    %v721 = vadd.f32 %v633, %v720
    %v722 = vpop.f32.mrb[0].mxu0
    %723 = vdwg.mxu0
    %724 = vst [vmem:[#allocation22] sm:$0xff] %v718
    %725 = vst [vmem:[#allocation22 + $0x8] sm:$0xff] %v721
    // Predicated region
    $region98: #{tpu_custom_call.1} parent=1 // pred_check
      _
    $region99: #{tpu_custom_call.1} parent=1 // pred_check_branch
      %727 = sbr.rel (0) target = $region101
    $region100: #{tpu_custom_call.1} parent=1 // pred_region
      %s729 = ssub.s32 256, 256
      %730 = vsyncadd [#allocation4], %s729
      %s731 = sshll.u32 [#allocation22], 4
      %s732 = int_to_ptr.vmem [resolvable:$true] %s731
      %737 = dma.vmem_to_hbm [thread:$0]  %s732, 256, %s12, [#allocation4], 128, 128, 8
    $region101: #{tpu_custom_call.1} parent=1 // pred_fallthru
      _
    // Predicated region
    $region102: #{tpu_custom_call.1} parent=1 // pred_check
      _
    $region103: #{tpu_custom_call.1} parent=1 // pred_check_branch
      %739 = sbr.rel (0) target = $region105
    $region104: #{tpu_custom_call.1} parent=1 // pred_region
      %740 = dma.done [#allocation4], 256
    $region105: #{tpu_custom_call.1} parent=1 // pred_fallthru
      _
    %741 = vsyncpa [#allocation3], 1
    %742 = vsyncpa [#allocation6], 1
    %743 = vsyncpa [#allocation9], 1
    %744 = vsyncpa [#allocation12], 1
    %745 = vsyncpa [#allocation15], 1
    %746 = vsyncpa [#allocation18], 1
    %747 = vsyncpa [#allocation21], 1
    %748 = vsyncpa [#allocation4], 1

</llo_original>
